<compile_context>
chip_gen: v6e
topology: v6e:2x2x1
jax: 0.10.0
libtpu: 0.0.40
codegen_flags: <defaults>
</compile_context>

<pallas_src>
import functools
import math

import jax
import jax.numpy as jnp
from jax.experimental import pallas as pl
from jax.experimental.pallas import tpu as pltpu


# ----------------------------------------------------------------------------
# Fused kernel: Bt bags per grid step.
# ----------------------------------------------------------------------------
def bgatt_kernel(x_ref, ra_ref, w_emb_ref, w_ra_ref, b_emb_ref,
                 wi_ref, v_ref, wb_ref, wf_ref, bf_ref,
                 out_ref, hi_ref, attn_ref, *, bt, k):
    c_dim = wi_ref.shape[1]
    d_dim = v_ref.shape[0]

    x = x_ref[...]                                       # (bt*k, input_dim)
    ra = ra_ref[...]                                     # (bt*k, 1)

    # --- FeatureExtractor: fx = [fc1(x) | fc2(ra)] folded into one lane-dense
    #     MXU matmul + broadcast MAC (weights pre-padded at prep time).
    fx = (jnp.dot(x, w_emb_ref[...], preferred_element_type=jnp.float32)
          + ra * w_ra_ref[...]
          + b_emb_ref[...])                              # (bt*k, D)

    # --- Instance attention: softmax over concepts (lane axis).
    logits_i = jnp.dot(fx, wi_ref[...],
                       preferred_element_type=jnp.float32)        # (bt*k, C)
    m_i = jnp.max(logits_i, axis=-1, keepdims=True)
    e_i = jnp.exp(logits_i - m_i)
    inv_i = pl.reciprocal(jnp.sum(e_i, axis=-1, keepdims=True), approx=True)
    aw_i = e_i * inv_i                                   # (bt*k, C)

    # Per-bag 3D views (leading-dim split only; layout-preserving for k == 8).
    fx3 = fx.reshape(bt, k, d_dim)                       # (bt, k, D)
    awi3 = aw_i.reshape(bt, k, c_dim)                    # (bt, k, C)

    # --- H_I and H_B per concept: broadcast MAC + sublane reduce over k keeps
    #     the tiny per-bag contractions on VPU/XLU instead of the MXU.
    v_w = v_ref[...]                                     # (D, E)
    wb_row = wb_ref[...]                                 # (1, E)
    h_list, hb_list, lb_list = [], [], []
    for c in range(c_dim):
        h_c = jnp.sum(awi3[:, :, c:c + 1] * fx3, axis=1)           # (bt, D)
        hb_c = jnp.dot(h_c, v_w, preferred_element_type=jnp.float32)  # (bt, E)
        h_list.append(h_c)
        hb_list.append(hb_c)
        # Bag logit for concept c: elementwise multiply + lane reduce
        # (replaces the N=1 MXU matmul H_B @ w_b).
        lb_list.append(jnp.sum(hb_c * wb_row, axis=-1, keepdims=True))  # (bt,1)

    # Lane-dense H_I slab: (bt, C*D) -> unmasked full-width stores.
    hi_ref[...] = jnp.concatenate(h_list, axis=-1)

    # --- Bag attention: softmax over concepts.
    logits_b = jnp.concatenate(lb_list, axis=-1)         # (bt, C)
    m_b = jnp.max(logits_b, axis=-1, keepdims=True)
    e_b = jnp.exp(logits_b - m_b)
    inv_b = pl.reciprocal(jnp.sum(e_b, axis=-1, keepdims=True), approx=True)
    aw_b = e_b * inv_b                                   # (bt, C)

    # b = sum_c aw_b[:, c] * H_B[:, c, :]  (VPU MACs).
    b_vec = aw_b[:, 0:1] * hb_list[0]
    for c in range(1, c_dim):
        b_vec = b_vec + aw_b[:, c:c + 1] * hb_list[c]    # (bt, E)

    # attn = A_I @ A_B as elementwise multiply + lane reduce over C.
    attn_ref[...] = jnp.sum(awi3 * aw_b[:, None, :], axis=-1)      # (bt, k)

    # --- Classification head: ReLU -> Linear.
    out_ref[...] = (jnp.dot(jnp.maximum(b_vec, 0.0), wf_ref[...],
                            preferred_element_type=jnp.float32)
                    + bf_ref[...])                       # (bt, n_cls)


# ----------------------------------------------------------------------------
# Host wrapper
# ----------------------------------------------------------------------------
def _choose_bag_tile(B, k):
    """Bag tile Bt: divides B, keeps blocks 8-sublane aligned (Bt%8==0 or
    Bt==B), targets >=128 MXU rows per step, and keeps >=2 grid steps
    (so v7x's two TensorCores both get work) whenever B allows it."""
    cands = [d for d in range(1, B + 1)
             if B % d == 0 and (d % 8 == 0 or d == B)]
    multi = [d for d in cands if B // d >= 2]
    pool = multi if multi else cands
    good = [d for d in pool if d * k >= 128]
    return min(good) if good else max(pool)


def bgatt_forward(x, ra, kp):
    B, k, input_dim = x.shape
    D, C = kp["wi"].shape
    E = kp["v"].shape[1]
    ncls = kp["bf"].shape[1]

    bt = _choose_bag_tile(B, k)
    grid = (B // bt,)

    # Flatten instances in the wrapper (XLA metadata-only) so the kernel's
    # matmuls see a single (bt*k, .) operand per step.
    xf = x.reshape(B * k, input_dim)
    raf = ra.reshape(B * k, 1)

    def resident(arr):
        # Whole-array block with a constant index -> stays resident in VMEM
        # across the batch grid (no re-DMA per step).  All weights are 2D.
        return pl.BlockSpec(arr.shape, lambda b: (0, 0))

    weights = (kp["w_emb"], kp["w_ra"], kp["b_emb"], kp["wi"], kp["v"],
               kp["wb_row"], kp["wf"], kp["bf"])

    out, hi_slab, attn2 = pl.pallas_call(
        functools.partial(bgatt_kernel, bt=bt, k=k),
        grid=grid,
        in_specs=[
            pl.BlockSpec((bt * k, input_dim), lambda b: (b, 0)),
            pl.BlockSpec((bt * k, 1), lambda b: (b, 0)),
        ] + [resident(w) for w in weights],
        out_specs=[
            pl.BlockSpec((bt, ncls), lambda b: (b, 0)),
            pl.BlockSpec((bt, C * D), lambda b: (b, 0)),   # lane-dense slab
            pl.BlockSpec((bt, k), lambda b: (b, 0)),
        ],
        out_shape=[
            jax.ShapeDtypeStruct((B, ncls), jnp.float32),
            jax.ShapeDtypeStruct((B, C * D), jnp.float32),
            jax.ShapeDtypeStruct((B, k), jnp.float32),
        ],
        compiler_params=pltpu.CompilerParams(
            dimension_semantics=("parallel",)),
    )(xf, raf, *weights)

    # Wrapper-side reshapes back to the module's output layout.
    return out, hi_slab.reshape(B, C, D), attn2.reshape(B, k, 1)


# ----------------------------------------------------------------------------
# Parameters (PyTorch-like layout) and one-time kernel-layout preparation
# ----------------------------------------------------------------------------
def init_params(key, input_dim, D, C, E, num_class):
    half = D // 2
    ks = jax.random.split(key, 9)

    def uniform(k, shape, bound):
        return jax.random.uniform(k, shape, jnp.float32, -bound, bound)

    def xavier(k, shape):
        return uniform(k, shape, math.sqrt(6.0 / (shape[0] + shape[1])))

    b1 = 1.0 / math.sqrt(input_dim)
    bf = 1.0 / math.sqrt(E)
    return {
        "fc1_w": uniform(ks[0], (half, input_dim), b1),   # nn.Linear layout
        "fc1_b": uniform(ks[1], (half,), b1),
        "fc2_w": uniform(ks[2], (half, 1), 1.0),
        "fc2_b": uniform(ks[3], (half,), 1.0),
        "wi": xavier(ks[4], (D, C)),                      # instance_concept_weights
        "v": xavier(ks[5], (D, E)),                       # bag_transform_weights
        "wb": xavier(ks[6], (E, 1)),                      # bag_concept_weights
        "fc_w": uniform(ks[7], (num_class, E), bf),       # head Linear
        "fc_b": uniform(ks[8], (num_class,), bf),
    }


def prepare_kernel_params(p, input_dim, D):
    """Precompute all weight-layout transforms once (not per forward)."""
    half = D // 2
    # fc1/fc2 + concat folded into one (input_dim, D) matmul + (1, D) MAC.
    w_emb = jnp.concatenate(
        [p["fc1_w"].T, jnp.zeros((input_dim, D - half), jnp.float32)], axis=1)
    w_ra = jnp.concatenate(
        [jnp.zeros((1, half), jnp.float32), p["fc2_w"].T], axis=1)
    b_emb = jnp.concatenate([p["fc1_b"], p["fc2_b"]]).reshape(1, D)
    return {
        "w_emb": w_emb,                    # (input_dim, D)
        "w_ra": w_ra,                      # (1, D)
        "b_emb": b_emb,                    # (1, D)
        "wi": p["wi"],                     # (D, C)
        "v": p["v"],                       # (D, E)
        "wb_row": p["wb"].T,               # (1, E)  lane-reduce layout
        "wf": p["fc_w"].T,                 # (E, num_class)
        "bf": p["fc_b"].reshape(1, -1),    # (1, num_class)
    }


# ----------------------------------------------------------------------------
# Pure-JAX reference (follows the PyTorch module exactly)
# ----------------------------------------------------------------------------
def ref_forward(x, ra, p):
    B, k, input_dim = x.shape
    xf = x.reshape(B * k, input_dim)
    raf = ra.reshape(B * k, 1)
    y1 = xf @ p["fc1_w"].T + p["fc1_b"]
    y2 = raf @ p["fc2_w"].T + p["fc2_b"]
    fx = jnp.concatenate([y1, y2], axis=1).reshape(B, k, -1)

    aw_i = jax.nn.softmax(jnp.einsum("bkd,dc->bkc", fx, p["wi"]), axis=2)
    h_i = jnp.einsum("bkc,bkd->bcd", aw_i, fx)
    h_b = jnp.einsum("bcd,de->bce", h_i, p["v"])
    aw_b = jax.nn.softmax(jnp.einsum("bce,eo->bco", h_b, p["wb"]), axis=1)
    b_vec = jnp.einsum("bco,bce->be", aw_b, h_b)
    attn = jnp.einsum("bkc,bco->bko", aw_i, aw_b)
    out = jnp.maximum(b_vec, 0.0) @ p["fc_w"].T + p["fc_b"]
    return out, h_i, attn


if __name__ == "__main__":
    B, k = 32, 8                      # bags, instances per bag (Bt*k = 128)
    input_dim = 16
    instance_embedding_dim = 32       # D (even); C*D = 128 -> lane-dense slab
    num_instance_concepts = 4         # C
    bag_embedding_dim = 64            # E
    num_class = 3

    key = jax.random.PRNGKey(0)
    kx, kra, kpk = jax.random.split(key, 3)
    x = jax.random.normal(kx, (B, k, input_dim), jnp.float32)
    ra = jax.random.normal(kra, (B, k, 1), jnp.float32)

    params = init_params(kpk, input_dim, instance_embedding_dim,
                         num_instance_concepts, bag_embedding_dim, num_class)
    kparams = prepare_kernel_params(params, input_dim, instance_embedding_dim)

    out, h_i, attn = jax.block_until_ready(
        jax.jit(bgatt_forward)(x, ra, kparams))

    ref_out, ref_hi, ref_attn = jax.block_until_ready(
        ref_forward(x, ra, params))

    assert out.shape == (B, num_class), out.shape
    assert h_i.shape == (B, num_instance_concepts, instance_embedding_dim)
    assert attn.shape == (B, k, 1), attn.shape
    # 5e-3 tolerance: approx EUP reciprocal in the two softmaxes; everything
    # else is exact f32 (exact divides would recover 1e-4 agreement).
    assert jnp.allclose(out, ref_out, rtol=5e-3, atol=5e-3), "outputs mismatch"
    assert jnp.allclose(h_i, ref_hi, rtol=5e-3, atol=5e-3), "H_I mismatch"
    assert jnp.allclose(attn, ref_attn, rtol=5e-3, atol=5e-3), "attn mismatch"

    print("KERNEL_OK")
</pallas_src>

<mosaic_0001>
module attributes {stable_mosaic.version = 11 : i64} {
  func.func @bgatt_kernel(%arg0: i32, %arg1: memref<128x16xf32, #tpu.memory_space<vmem>>, %arg2: memref<128x1xf32, #tpu.memory_space<vmem>>, %arg3: memref<16x32xf32, #tpu.memory_space<vmem>>, %arg4: memref<1x32xf32, #tpu.memory_space<vmem>>, %arg5: memref<1x32xf32, #tpu.memory_space<vmem>>, %arg6: memref<32x4xf32, #tpu.memory_space<vmem>>, %arg7: memref<32x64xf32, #tpu.memory_space<vmem>>, %arg8: memref<1x64xf32, #tpu.memory_space<vmem>>, %arg9: memref<64x3xf32, #tpu.memory_space<vmem>>, %arg10: memref<1x3xf32, #tpu.memory_space<vmem>>, %arg11: memref<16x3xf32, #tpu.memory_space<vmem>>, %arg12: memref<16x128xf32, #tpu.memory_space<vmem>>, %arg13: memref<16x8xf32, #tpu.memory_space<vmem>>) attributes {dimension_semantics = [#tpu.dimension_semantics<parallel>], iteration_bounds = array<i64: 2>, scalar_prefetch = 0 : i64, scratch_operands = 0 : i64, tpu.core_type = #tpu.core_type<tc>, window_params = [{transform_indices = @transform_0, window_bounds = array<i64: 128, 16>}, {transform_indices = @transform_1, window_bounds = array<i64: 128, 1>}, {pipeline_mode = #tpu.pipeline_mode<synchronous>, transform_indices = @transform_2, window_bounds = array<i64: 16, 32>}, {pipeline_mode = #tpu.pipeline_mode<synchronous>, transform_indices = @transform_3, window_bounds = array<i64: 1, 32>}, {pipeline_mode = #tpu.pipeline_mode<synchronous>, transform_indices = @transform_4, window_bounds = array<i64: 1, 32>}, {pipeline_mode = #tpu.pipeline_mode<synchronous>, transform_indices = @transform_5, window_bounds = array<i64: 32, 4>}, {pipeline_mode = #tpu.pipeline_mode<synchronous>, transform_indices = @transform_6, window_bounds = array<i64: 32, 64>}, {pipeline_mode = #tpu.pipeline_mode<synchronous>, transform_indices = @transform_7, window_bounds = array<i64: 1, 64>}, {pipeline_mode = #tpu.pipeline_mode<synchronous>, transform_indices = @transform_8, window_bounds = array<i64: 64, 3>}, {pipeline_mode = #tpu.pipeline_mode<synchronous>, transform_indices = @transform_9, window_bounds = array<i64: 1, 3>}, {transform_indices = @transform_10, window_bounds = array<i64: 16, 3>}, {transform_indices = @transform_11, window_bounds = array<i64: 16, 128>}, {transform_indices = @transform_12, window_bounds = array<i64: 16, 8>}]} {
    %c0 = arith.constant 0 : index
    %c0_0 = arith.constant 0 : index
    %0 = vector.load %arg1[%c0, %c0_0] : memref<128x16xf32, #tpu.memory_space<vmem>>, vector<128x16xf32>
    %c0_1 = arith.constant 0 : index
    %c0_2 = arith.constant 0 : index
    %1 = vector.load %arg2[%c0_1, %c0_2] : memref<128x1xf32, #tpu.memory_space<vmem>>, vector<128x1xf32>
    %c0_3 = arith.constant 0 : index
    %c0_4 = arith.constant 0 : index
    %2 = vector.load %arg3[%c0_3, %c0_4] : memref<16x32xf32, #tpu.memory_space<vmem>>, vector<16x32xf32>
    %cst = arith.constant dense<0.000000e+00> : vector<128x32xf32>
    %3 = tpu.matmul %0, %2, %cst {dimension_numbers = #tpu.dot_dimension_numbers<[1], [0], [0], [1], [0, 0, 1, 1], [], []>} : vector<128x16xf32>, vector<16x32xf32>, vector<128x32xf32> -> vector<128x32xf32>
    %c0_5 = arith.constant 0 : index
    %c0_6 = arith.constant 0 : index
    %4 = vector.load %arg4[%c0_5, %c0_6] : memref<1x32xf32, #tpu.memory_space<vmem>>, vector<1x32xf32>
    %5 = vector.broadcast %1 : vector<128x1xf32> to vector<128x32xf32>
    %6 = vector.broadcast %4 : vector<1x32xf32> to vector<128x32xf32>
    %7 = arith.mulf %5, %6 : vector<128x32xf32>
    %8 = arith.addf %3, %7 : vector<128x32xf32>
    %c0_7 = arith.constant 0 : index
    %c0_8 = arith.constant 0 : index
    %9 = vector.load %arg5[%c0_7, %c0_8] : memref<1x32xf32, #tpu.memory_space<vmem>>, vector<1x32xf32>
    %10 = vector.broadcast %9 : vector<1x32xf32> to vector<128x32xf32>
    %11 = arith.addf %8, %10 : vector<128x32xf32>
    %c0_9 = arith.constant 0 : index
    %c0_10 = arith.constant 0 : index
    %12 = vector.load %arg6[%c0_9, %c0_10] : memref<32x4xf32, #tpu.memory_space<vmem>>, vector<32x4xf32>
    %cst_11 = arith.constant dense<0.000000e+00> : vector<128x4xf32>
    %13 = tpu.matmul %11, %12, %cst_11 {dimension_numbers = #tpu.dot_dimension_numbers<[1], [0], [0], [1], [0, 0, 1, 1], [], []>} : vector<128x32xf32>, vector<32x4xf32>, vector<128x4xf32> -> vector<128x4xf32>
    %cst_12 = arith.constant dense<0xFF800000> : vector<128xf32>
    %14 = vector.multi_reduction <maximumf>, %13, %cst_12 [1] : vector<128x4xf32> to vector<128xf32>
    %15 = vector.shape_cast %14 : vector<128xf32> to vector<128x1xf32>
    %16 = vector.broadcast %15 : vector<128x1xf32> to vector<128x4xf32>
    %17 = arith.subf %13, %16 : vector<128x4xf32>
    %18 = math.exp %17 : vector<128x4xf32>
    %cst_13 = arith.constant dense<0.000000e+00> : vector<128xf32>
    %19 = vector.multi_reduction <add>, %18, %cst_13 [1] : vector<128x4xf32> to vector<128xf32>
    %20 = vector.shape_cast %19 : vector<128xf32> to vector<128x1xf32>
    %21 = tpu.reciprocal %20 {approx = true} : vector<128x1xf32> -> vector<128x1xf32>
    %22 = vector.broadcast %21 : vector<128x1xf32> to vector<128x4xf32>
    %23 = arith.mulf %18, %22 : vector<128x4xf32>
    %24 = vector.shape_cast %11 : vector<128x32xf32> to vector<16x8x32xf32>
    %25 = vector.shape_cast %23 : vector<128x4xf32> to vector<16x8x4xf32>
    %c0_14 = arith.constant 0 : index
    %c0_15 = arith.constant 0 : index
    %26 = vector.load %arg7[%c0_14, %c0_15] : memref<32x64xf32, #tpu.memory_space<vmem>>, vector<32x64xf32>
    %c0_16 = arith.constant 0 : index
    %c0_17 = arith.constant 0 : index
    %27 = vector.load %arg8[%c0_16, %c0_17] : memref<1x64xf32, #tpu.memory_space<vmem>>, vector<1x64xf32>
    %28 = vector.extract_strided_slice %25 {offsets = [0, 0, 0], sizes = [16, 8, 1], strides = [1, 1, 1]} : vector<16x8x4xf32> to vector<16x8x1xf32>
    %29 = vector.broadcast %28 : vector<16x8x1xf32> to vector<16x8x32xf32>
    %30 = arith.mulf %29, %24 : vector<16x8x32xf32>
    %cst_18 = arith.constant dense<0.000000e+00> : vector<16x32xf32>
    %31 = vector.multi_reduction <add>, %30, %cst_18 [1] : vector<16x8x32xf32> to vector<16x32xf32>
    %cst_19 = arith.constant dense<0.000000e+00> : vector<16x64xf32>
    %32 = tpu.matmul %31, %26, %cst_19 {dimension_numbers = #tpu.dot_dimension_numbers<[1], [0], [0], [1], [0, 0, 1, 1], [], []>} : vector<16x32xf32>, vector<32x64xf32>, vector<16x64xf32> -> vector<16x64xf32>
    %33 = vector.broadcast %27 : vector<1x64xf32> to vector<16x64xf32>
    %34 = arith.mulf %32, %33 : vector<16x64xf32>
    %cst_20 = arith.constant dense<0.000000e+00> : vector<16xf32>
    %35 = vector.multi_reduction <add>, %34, %cst_20 [1] : vector<16x64xf32> to vector<16xf32>
    %36 = vector.shape_cast %35 : vector<16xf32> to vector<16x1xf32>
    %37 = vector.extract_strided_slice %25 {offsets = [0, 0, 1], sizes = [16, 8, 1], strides = [1, 1, 1]} : vector<16x8x4xf32> to vector<16x8x1xf32>
    %38 = vector.broadcast %37 : vector<16x8x1xf32> to vector<16x8x32xf32>
    %39 = arith.mulf %38, %24 : vector<16x8x32xf32>
    %cst_21 = arith.constant dense<0.000000e+00> : vector<16x32xf32>
    %40 = vector.multi_reduction <add>, %39, %cst_21 [1] : vector<16x8x32xf32> to vector<16x32xf32>
    %cst_22 = arith.constant dense<0.000000e+00> : vector<16x64xf32>
    %41 = tpu.matmul %40, %26, %cst_22 {dimension_numbers = #tpu.dot_dimension_numbers<[1], [0], [0], [1], [0, 0, 1, 1], [], []>} : vector<16x32xf32>, vector<32x64xf32>, vector<16x64xf32> -> vector<16x64xf32>
    %42 = vector.broadcast %27 : vector<1x64xf32> to vector<16x64xf32>
    %43 = arith.mulf %41, %42 : vector<16x64xf32>
    %cst_23 = arith.constant dense<0.000000e+00> : vector<16xf32>
    %44 = vector.multi_reduction <add>, %43, %cst_23 [1] : vector<16x64xf32> to vector<16xf32>
    %45 = vector.shape_cast %44 : vector<16xf32> to vector<16x1xf32>
    %46 = vector.extract_strided_slice %25 {offsets = [0, 0, 2], sizes = [16, 8, 1], strides = [1, 1, 1]} : vector<16x8x4xf32> to vector<16x8x1xf32>
    %47 = vector.broadcast %46 : vector<16x8x1xf32> to vector<16x8x32xf32>
    %48 = arith.mulf %47, %24 : vector<16x8x32xf32>
    %cst_24 = arith.constant dense<0.000000e+00> : vector<16x32xf32>
    %49 = vector.multi_reduction <add>, %48, %cst_24 [1] : vector<16x8x32xf32> to vector<16x32xf32>
    %cst_25 = arith.constant dense<0.000000e+00> : vector<16x64xf32>
    %50 = tpu.matmul %49, %26, %cst_25 {dimension_numbers = #tpu.dot_dimension_numbers<[1], [0], [0], [1], [0, 0, 1, 1], [], []>} : vector<16x32xf32>, vector<32x64xf32>, vector<16x64xf32> -> vector<16x64xf32>
    %51 = vector.broadcast %27 : vector<1x64xf32> to vector<16x64xf32>
    %52 = arith.mulf %50, %51 : vector<16x64xf32>
    %cst_26 = arith.constant dense<0.000000e+00> : vector<16xf32>
    %53 = vector.multi_reduction <add>, %52, %cst_26 [1] : vector<16x64xf32> to vector<16xf32>
    %54 = vector.shape_cast %53 : vector<16xf32> to vector<16x1xf32>
    %55 = vector.extract_strided_slice %25 {offsets = [0, 0, 3], sizes = [16, 8, 1], strides = [1, 1, 1]} : vector<16x8x4xf32> to vector<16x8x1xf32>
    %56 = vector.broadcast %55 : vector<16x8x1xf32> to vector<16x8x32xf32>
    %57 = arith.mulf %56, %24 : vector<16x8x32xf32>
    %cst_27 = arith.constant dense<0.000000e+00> : vector<16x32xf32>
    %58 = vector.multi_reduction <add>, %57, %cst_27 [1] : vector<16x8x32xf32> to vector<16x32xf32>
    %cst_28 = arith.constant dense<0.000000e+00> : vector<16x64xf32>
    %59 = tpu.matmul %58, %26, %cst_28 {dimension_numbers = #tpu.dot_dimension_numbers<[1], [0], [0], [1], [0, 0, 1, 1], [], []>} : vector<16x32xf32>, vector<32x64xf32>, vector<16x64xf32> -> vector<16x64xf32>
    %60 = vector.broadcast %27 : vector<1x64xf32> to vector<16x64xf32>
    %61 = arith.mulf %59, %60 : vector<16x64xf32>
    %cst_29 = arith.constant dense<0.000000e+00> : vector<16xf32>
    %62 = vector.multi_reduction <add>, %61, %cst_29 [1] : vector<16x64xf32> to vector<16xf32>
    %63 = vector.shape_cast %62 : vector<16xf32> to vector<16x1xf32>
    %64 = tpu.concatenate %31, %40, %49, %58 in 1 : vector<16x32xf32>, vector<16x32xf32>, vector<16x32xf32>, vector<16x32xf32> -> vector<16x128xf32>
    %c0_30 = arith.constant 0 : index
    %c0_31 = arith.constant 0 : index
    %65 = vector.load %arg12[%c0_30, %c0_31] : memref<16x128xf32, #tpu.memory_space<vmem>>, vector<16x128xf32>
    tpu.vector_store %arg12[%c0_30, %c0_31], %64 {strides = array<i32>} : memref<16x128xf32, #tpu.memory_space<vmem>>, vector<16x128xf32>,
    %66 = tpu.concatenate %36, %45, %54, %63 in 1 : vector<16x1xf32>, vector<16x1xf32>, vector<16x1xf32>, vector<16x1xf32> -> vector<16x4xf32>
    %cst_32 = arith.constant dense<0xFF800000> : vector<16xf32>
    %67 = vector.multi_reduction <maximumf>, %66, %cst_32 [1] : vector<16x4xf32> to vector<16xf32>
    %68 = vector.shape_cast %67 : vector<16xf32> to vector<16x1xf32>
    %69 = vector.broadcast %68 : vector<16x1xf32> to vector<16x4xf32>
    %70 = arith.subf %66, %69 : vector<16x4xf32>
    %71 = math.exp %70 : vector<16x4xf32>
    %cst_33 = arith.constant dense<0.000000e+00> : vector<16xf32>
    %72 = vector.multi_reduction <add>, %71, %cst_33 [1] : vector<16x4xf32> to vector<16xf32>
    %73 = vector.shape_cast %72 : vector<16xf32> to vector<16x1xf32>
    %74 = tpu.reciprocal %73 {approx = true} : vector<16x1xf32> -> vector<16x1xf32>
    %75 = vector.broadcast %74 : vector<16x1xf32> to vector<16x4xf32>
    %76 = arith.mulf %71, %75 : vector<16x4xf32>
    %77 = vector.extract_strided_slice %76 {offsets = [0, 0], sizes = [16, 1], strides = [1, 1]} : vector<16x4xf32> to vector<16x1xf32>
    %78 = vector.broadcast %77 : vector<16x1xf32> to vector<16x64xf32>
    %79 = arith.mulf %78, %32 : vector<16x64xf32>
    %80 = vector.extract_strided_slice %76 {offsets = [0, 1], sizes = [16, 1], strides = [1, 1]} : vector<16x4xf32> to vector<16x1xf32>
    %81 = vector.broadcast %80 : vector<16x1xf32> to vector<16x64xf32>
    %82 = arith.mulf %81, %41 : vector<16x64xf32>
    %83 = arith.addf %79, %82 : vector<16x64xf32>
    %84 = vector.extract_strided_slice %76 {offsets = [0, 2], sizes = [16, 1], strides = [1, 1]} : vector<16x4xf32> to vector<16x1xf32>
    %85 = vector.broadcast %84 : vector<16x1xf32> to vector<16x64xf32>
    %86 = arith.mulf %85, %50 : vector<16x64xf32>
    %87 = arith.addf %83, %86 : vector<16x64xf32>
    %88 = vector.extract_strided_slice %76 {offsets = [0, 3], sizes = [16, 1], strides = [1, 1]} : vector<16x4xf32> to vector<16x1xf32>
    %89 = vector.broadcast %88 : vector<16x1xf32> to vector<16x64xf32>
    %90 = arith.mulf %89, %59 : vector<16x64xf32>
    %91 = arith.addf %87, %90 : vector<16x64xf32>
    %92 = vector.shape_cast %76 : vector<16x4xf32> to vector<16x1x4xf32>
    %93 = vector.broadcast %92 : vector<16x1x4xf32> to vector<16x8x4xf32>
    %94 = arith.mulf %25, %93 : vector<16x8x4xf32>
    %cst_34 = arith.constant dense<0.000000e+00> : vector<16x8xf32>
    %95 = vector.multi_reduction <add>, %94, %cst_34 [2] : vector<16x8x4xf32> to vector<16x8xf32>
    %c0_35 = arith.constant 0 : index
    %c0_36 = arith.constant 0 : index
    %96 = vector.load %arg13[%c0_35, %c0_36] : memref<16x8xf32, #tpu.memory_space<vmem>>, vector<16x8xf32>
    tpu.vector_store %arg13[%c0_35, %c0_36], %95 {strides = array<i32>} : memref<16x8xf32, #tpu.memory_space<vmem>>, vector<16x8xf32>,
    %cst_37 = arith.constant 0.000000e+00 : f32
    %97 = vector.broadcast %cst_37 : f32 to vector<16x64xf32>
    %98 = arith.maximumf %91, %97 : vector<16x64xf32>
    %c0_38 = arith.constant 0 : index
    %c0_39 = arith.constant 0 : index
    %99 = vector.load %arg9[%c0_38, %c0_39] : memref<64x3xf32, #tpu.memory_space<vmem>>, vector<64x3xf32>
    %cst_40 = arith.constant dense<0.000000e+00> : vector<16x3xf32>
    %100 = tpu.matmul %98, %99, %cst_40 {dimension_numbers = #tpu.dot_dimension_numbers<[1], [0], [0], [1], [0, 0, 1, 1], [], []>} : vector<16x64xf32>, vector<64x3xf32>, vector<16x3xf32> -> vector<16x3xf32>
    %c0_41 = arith.constant 0 : index
    %c0_42 = arith.constant 0 : index
    %101 = vector.load %arg10[%c0_41, %c0_42] : memref<1x3xf32, #tpu.memory_space<vmem>>, vector<1x3xf32>
    %102 = vector.broadcast %101 : vector<1x3xf32> to vector<16x3xf32>
    %103 = arith.addf %100, %102 : vector<16x3xf32>
    %c0_43 = arith.constant 0 : index
    %c0_44 = arith.constant 0 : index
    %104 = vector.load %arg11[%c0_43, %c0_44] : memref<16x3xf32, #tpu.memory_space<vmem>>, vector<16x3xf32>
    tpu.vector_store %arg11[%c0_43, %c0_44], %103 {strides = array<i32>} : memref<16x3xf32, #tpu.memory_space<vmem>>, vector<16x3xf32>,
    return
  }
  func.func @transform_0(%arg0: i32) -> (i32, i32) {
    %c0_i32 = arith.constant 0 : i32
    %c0_i32_0 = arith.constant 0 : i32
    return %arg0, %c0_i32 : i32, i32
  }
  func.func @transform_1(%arg0: i32) -> (i32, i32) {
    %c0_i32 = arith.constant 0 : i32
    %c0_i32_0 = arith.constant 0 : i32
    return %arg0, %c0_i32 : i32, i32
  }
  func.func @transform_2(%arg0: i32) -> (i32, i32) {
    %c0_i32 = arith.constant 0 : i32
    %c0_i32_0 = arith.constant 0 : i32
    %c0_i32_1 = arith.constant 0 : i32
    return %c0_i32, %c0_i32_0 : i32, i32
  }
  func.func @transform_3(%arg0: i32) -> (i32, i32) {
    %c0_i32 = arith.constant 0 : i32
    %c0_i32_0 = arith.constant 0 : i32
    %c0_i32_1 = arith.constant 0 : i32
    return %c0_i32, %c0_i32_0 : i32, i32
  }
  func.func @transform_4(%arg0: i32) -> (i32, i32) {
    %c0_i32 = arith.constant 0 : i32
    %c0_i32_0 = arith.constant 0 : i32
    %c0_i32_1 = arith.constant 0 : i32
    return %c0_i32, %c0_i32_0 : i32, i32
  }
  func.func @transform_5(%arg0: i32) -> (i32, i32) {
    %c0_i32 = arith.constant 0 : i32
    %c0_i32_0 = arith.constant 0 : i32
    %c0_i32_1 = arith.constant 0 : i32
    return %c0_i32, %c0_i32_0 : i32, i32
  }
  func.func @transform_6(%arg0: i32) -> (i32, i32) {
    %c0_i32 = arith.constant 0 : i32
    %c0_i32_0 = arith.constant 0 : i32
    %c0_i32_1 = arith.constant 0 : i32
    return %c0_i32, %c0_i32_0 : i32, i32
  }
  func.func @transform_7(%arg0: i32) -> (i32, i32) {
    %c0_i32 = arith.constant 0 : i32
    %c0_i32_0 = arith.constant 0 : i32
    %c0_i32_1 = arith.constant 0 : i32
    return %c0_i32, %c0_i32_0 : i32, i32
  }
  func.func @transform_8(%arg0: i32) -> (i32, i32) {
    %c0_i32 = arith.constant 0 : i32
    %c0_i32_0 = arith.constant 0 : i32
    %c0_i32_1 = arith.constant 0 : i32
    return %c0_i32, %c0_i32_0 : i32, i32
  }
  func.func @transform_9(%arg0: i32) -> (i32, i32) {
    %c0_i32 = arith.constant 0 : i32
    %c0_i32_0 = arith.constant 0 : i32
    %c0_i32_1 = arith.constant 0 : i32
    return %c0_i32, %c0_i32_0 : i32, i32
  }
  func.func @transform_10(%arg0: i32) -> (i32, i32) {
    %c0_i32 = arith.constant 0 : i32
    %c0_i32_0 = arith.constant 0 : i32
    return %arg0, %c0_i32 : i32, i32
  }
  func.func @transform_11(%arg0: i32) -> (i32, i32) {
    %c0_i32 = arith.constant 0 : i32
    %c0_i32_0 = arith.constant 0 : i32
    return %arg0, %c0_i32 : i32, i32
  }
  func.func @transform_12(%arg0: i32) -> (i32, i32) {
    %c0_i32 = arith.constant 0 : i32
    %c0_i32_0 = arith.constant 0 : i32
    return %arg0, %c0_i32 : i32, i32
  }
}

</mosaic_0001>

<llo_original>
// kernel: bgatt_forward.1
$region0: #{bgatt_forward.1}
  #allocation0 [shape = 'u32[]', space=smem, size = 0x4, offset = 0x4, fixed_abs, tag = 'smem constant byte address 0x4 - core index']
  #allocation1 [shape = 'u32[144,128]{1,0:T(1,128)}', space=vmem, size = 0x12000, scoped, tag = 'internal scratch']
  %s0 = inlined_call_operand.vmem [shape: f32[256,16], index: 0, kind: input, shape index: {}]
  %s1 = inlined_call_operand.vmem [shape: f32[256,1], index: 1, kind: input, shape index: {}]
  %s2 = inlined_call_operand.vmem [shape: f32[16,32], index: 2, kind: input, shape index: {}]
  %s3 = inlined_call_operand.vmem [shape: f32[1,32], index: 3, kind: input, shape index: {}]
  %s4 = inlined_call_operand.vmem [shape: f32[1,32], index: 4, kind: input, shape index: {}]
  %s5 = inlined_call_operand.vmem [shape: f32[32,4], index: 5, kind: input, shape index: {}]
  %s6 = inlined_call_operand.vmem [shape: f32[32,64], index: 6, kind: input, shape index: {}]
  %s7 = inlined_call_operand.vmem [shape: f32[1,64], index: 7, kind: input, shape index: {}]
  %s8 = inlined_call_operand.vmem [shape: f32[64,3], index: 8, kind: input, shape index: {}]
  %s9 = inlined_call_operand.vmem [shape: f32[1,3], index: 9, kind: input, shape index: {}]
  %s10 = inlined_call_operand.vmem [shape: f32[32,3], index: 10, kind: output, shape index: {0}]
  %s11 = inlined_call_operand.vmem [shape: f32[32,128], index: 11, kind: output, shape index: {1}]
  %s12 = inlined_call_operand.vmem [shape: f32[32,8], index: 12, kind: output, shape index: {2}]
  %13 = xla_tuple %s10, %s11, %s12
  %s14 = sld [smem:[#allocation0]]
  $region89: #{bgatt_forward.1} parent=0
    _
  %s16 = ssub.s32 1, %s14
  %s17 = scalar_select 0, %s16, %s14
  loop: start=0, step=1, limit=4
  $region2: #{bgatt_forward.1} parent=0 // loop_pre_header
    _
  $region3: #{bgatt_forward.1} parent=0 // loop_header
    %s19 = sphi 0, %s23
    %p20 = scmp.ge.s32.totalorder %s19, 4
    %s29 = sphi 0, %s31
    %s32 = sphi 0, %s29
    %s33 = sphi 0, %s32
    %s49 = sphi 0, %s33
    %s55 = sphi 0, %s57
    %s58 = sphi 0, %s55
    %s59 = sphi 0, %s58
    %s75 = sphi 0, %s59
    %s79 = sphi 0, %s79
    %s81 = sphi 0, %s79
    %s82 = sphi 0, %s81
    %s96 = sphi 0, %s82
    %s100 = sphi 0, %s100
    %s102 = sphi 0, %s100
    %s103 = sphi 0, %s102
    %s117 = sphi 0, %s103
    %s121 = sphi 0, %s121
    %s123 = sphi 0, %s121
    %s124 = sphi 0, %s123
    %s138 = sphi 0, %s124
    %s142 = sphi 0, %s142
    %s144 = sphi 0, %s142
    %s145 = sphi 0, %s144
    %s159 = sphi 0, %s145
    %s163 = sphi 0, %s163
    %s165 = sphi 0, %s163
    %s166 = sphi 0, %s165
    %s180 = sphi 0, %s166
    %s184 = sphi 0, %s184
    %s186 = sphi 0, %s184
    %s187 = sphi 0, %s186
    %s201 = sphi 0, %s187
    %s205 = sphi 0, %s205
    %s207 = sphi 0, %s205
    %s208 = sphi 0, %s207
    %s222 = sphi 0, %s208
    %s226 = sphi 0, %s226
    %s228 = sphi 0, %s226
    %s229 = sphi 0, %s228
    %s243 = sphi 0, %s229
    %s249 = sphi 0, %s251
    %s252 = sphi 0, %s249
    %s253 = sphi 0, %s252
    %s269 = sphi 0, %s253
    %s275 = sphi 0, %s277
    %s278 = sphi 0, %s275
    %s279 = sphi 0, %s278
    %s295 = sphi 0, %s279
    %s301 = sphi 0, %s303
    %s304 = sphi 0, %s301
    %s305 = sphi 0, %s304
    %s321 = sphi 0, %s305
  $region4: #{bgatt_forward.1} parent=0 // loop_header_branch
    %22 = sbr.rel (%p20) target = $region8
  $region5: #{bgatt_forward.1} parent=0 // loop_body
    %s24 = ssub.s32 %s19, 1
    %s25 = ssub.s32 %s19, 2
    %s26 = sadd.s32 %s19, 1
    %s27 = ssub.s32 %s19, %s26
    %p28 = scmp.eq.s32.totalorder %s27, 0
    %s30 = sadd.s32 %s29, 1
    %s31 = scalar_select %p28, %s29, %s30
    %p34 = pneg %p28
    %p35 = scmp.eq.s32.totalorder %s19, 1
    %p36 = por %p34, %p35
    %p37 = scmp.ne.s32.totalorder %s29, %s32
    %p38 = scmp.eq.s32.totalorder %s19, 0
    %p39 = por %p37, %p38
    %p40 = scmp.ne.s32.totalorder %s29, %s32
    %p41 = scmp.eq.s32.totalorder %s24, 1
    %p42 = por %p40, %p41
    %p43 = scmp.ne.s32.totalorder %s32, %s33
    %p44 = scmp.eq.s32.totalorder %s24, 0
    %p45 = por %p43, %p44
    %p46 = scmp.ne.s32.totalorder %s32, %s33
    %p47 = scmp.eq.s32.totalorder %s25, 1
    %p48 = por %p46, %p47
    %p50 = scmp.ne.s32.totalorder %s33, %s49
    %p51 = scmp.eq.s32.totalorder %s25, 0
    %p52 = por %p50, %p51
    %s53 = ssub.s32 %s19, %s26
    %p54 = scmp.eq.s32.totalorder %s53, 0
    %s56 = sadd.s32 %s55, 1
    %s57 = scalar_select %p54, %s55, %s56
    %p60 = pneg %p54
    %p61 = scmp.eq.s32.totalorder %s19, 1
    %p62 = por %p60, %p61
    %p63 = scmp.ne.s32.totalorder %s55, %s58
    %p64 = scmp.eq.s32.totalorder %s19, 0
    %p65 = por %p63, %p64
    %p66 = scmp.ne.s32.totalorder %s55, %s58
    %p67 = scmp.eq.s32.totalorder %s24, 1
    %p68 = por %p66, %p67
    %p69 = scmp.ne.s32.totalorder %s58, %s59
    %p70 = scmp.eq.s32.totalorder %s24, 0
    %p71 = por %p69, %p70
    %p72 = scmp.ne.s32.totalorder %s58, %s59
    %p73 = scmp.eq.s32.totalorder %s25, 1
    %p74 = por %p72, %p73
    %p76 = scmp.ne.s32.totalorder %s59, %s75
    %p77 = scmp.eq.s32.totalorder %s25, 0
    %p78 = por %p76, %p77
    %s80 = sadd.s32 %s79, 1
    %p83 = scmp.eq.s32.totalorder %s19, 1
    %p84 = scmp.ne.s32.totalorder %s79, %s81
    %p85 = scmp.eq.s32.totalorder %s19, 0
    %p86 = por %p84, %p85
    %p87 = scmp.ne.s32.totalorder %s79, %s81
    %p88 = scmp.eq.s32.totalorder %s24, 1
    %p89 = por %p87, %p88
    %p90 = scmp.ne.s32.totalorder %s81, %s82
    %p91 = scmp.eq.s32.totalorder %s24, 0
    %p92 = por %p90, %p91
    %p93 = scmp.ne.s32.totalorder %s81, %s82
    %p94 = scmp.eq.s32.totalorder %s25, 1
    %p95 = por %p93, %p94
    %p97 = scmp.ne.s32.totalorder %s82, %s96
    %p98 = scmp.eq.s32.totalorder %s25, 0
    %p99 = por %p97, %p98
    %s101 = sadd.s32 %s100, 1
    %p104 = scmp.eq.s32.totalorder %s19, 1
    %p105 = scmp.ne.s32.totalorder %s100, %s102
    %p106 = scmp.eq.s32.totalorder %s19, 0
    %p107 = por %p105, %p106
    %p108 = scmp.ne.s32.totalorder %s100, %s102
    %p109 = scmp.eq.s32.totalorder %s24, 1
    %p110 = por %p108, %p109
    %p111 = scmp.ne.s32.totalorder %s102, %s103
    %p112 = scmp.eq.s32.totalorder %s24, 0
    %p113 = por %p111, %p112
    %p114 = scmp.ne.s32.totalorder %s102, %s103
    %p115 = scmp.eq.s32.totalorder %s25, 1
    %p116 = por %p114, %p115
    %p118 = scmp.ne.s32.totalorder %s103, %s117
    %p119 = scmp.eq.s32.totalorder %s25, 0
    %p120 = por %p118, %p119
    %s122 = sadd.s32 %s121, 1
    %p125 = scmp.eq.s32.totalorder %s19, 1
    %p126 = scmp.ne.s32.totalorder %s121, %s123
    %p127 = scmp.eq.s32.totalorder %s19, 0
    %p128 = por %p126, %p127
    %p129 = scmp.ne.s32.totalorder %s121, %s123
    %p130 = scmp.eq.s32.totalorder %s24, 1
    %p131 = por %p129, %p130
    %p132 = scmp.ne.s32.totalorder %s123, %s124
    %p133 = scmp.eq.s32.totalorder %s24, 0
    %p134 = por %p132, %p133
    %p135 = scmp.ne.s32.totalorder %s123, %s124
    %p136 = scmp.eq.s32.totalorder %s25, 1
    %p137 = por %p135, %p136
    %p139 = scmp.ne.s32.totalorder %s124, %s138
    %p140 = scmp.eq.s32.totalorder %s25, 0
    %p141 = por %p139, %p140
    %s143 = sadd.s32 %s142, 1
    %p146 = scmp.eq.s32.totalorder %s19, 1
    %p147 = scmp.ne.s32.totalorder %s142, %s144
    %p148 = scmp.eq.s32.totalorder %s19, 0
    %p149 = por %p147, %p148
    %p150 = scmp.ne.s32.totalorder %s142, %s144
    %p151 = scmp.eq.s32.totalorder %s24, 1
    %p152 = por %p150, %p151
    %p153 = scmp.ne.s32.totalorder %s144, %s145
    %p154 = scmp.eq.s32.totalorder %s24, 0
    %p155 = por %p153, %p154
    %p156 = scmp.ne.s32.totalorder %s144, %s145
    %p157 = scmp.eq.s32.totalorder %s25, 1
    %p158 = por %p156, %p157
    %p160 = scmp.ne.s32.totalorder %s145, %s159
    %p161 = scmp.eq.s32.totalorder %s25, 0
    %p162 = por %p160, %p161
    %s164 = sadd.s32 %s163, 1
    %p167 = scmp.eq.s32.totalorder %s19, 1
    %p168 = scmp.ne.s32.totalorder %s163, %s165
    %p169 = scmp.eq.s32.totalorder %s19, 0
    %p170 = por %p168, %p169
    %p171 = scmp.ne.s32.totalorder %s163, %s165
    %p172 = scmp.eq.s32.totalorder %s24, 1
    %p173 = por %p171, %p172
    %p174 = scmp.ne.s32.totalorder %s165, %s166
    %p175 = scmp.eq.s32.totalorder %s24, 0
    %p176 = por %p174, %p175
    %p177 = scmp.ne.s32.totalorder %s165, %s166
    %p178 = scmp.eq.s32.totalorder %s25, 1
    %p179 = por %p177, %p178
    %p181 = scmp.ne.s32.totalorder %s166, %s180
    %p182 = scmp.eq.s32.totalorder %s25, 0
    %p183 = por %p181, %p182
    %s185 = sadd.s32 %s184, 1
    %p188 = scmp.eq.s32.totalorder %s19, 1
    %p189 = scmp.ne.s32.totalorder %s184, %s186
    %p190 = scmp.eq.s32.totalorder %s19, 0
    %p191 = por %p189, %p190
    %p192 = scmp.ne.s32.totalorder %s184, %s186
    %p193 = scmp.eq.s32.totalorder %s24, 1
    %p194 = por %p192, %p193
    %p195 = scmp.ne.s32.totalorder %s186, %s187
    %p196 = scmp.eq.s32.totalorder %s24, 0
    %p197 = por %p195, %p196
    %p198 = scmp.ne.s32.totalorder %s186, %s187
    %p199 = scmp.eq.s32.totalorder %s25, 1
    %p200 = por %p198, %p199
    %p202 = scmp.ne.s32.totalorder %s187, %s201
    %p203 = scmp.eq.s32.totalorder %s25, 0
    %p204 = por %p202, %p203
    %s206 = sadd.s32 %s205, 1
    %p209 = scmp.eq.s32.totalorder %s19, 1
    %p210 = scmp.ne.s32.totalorder %s205, %s207
    %p211 = scmp.eq.s32.totalorder %s19, 0
    %p212 = por %p210, %p211
    %p213 = scmp.ne.s32.totalorder %s205, %s207
    %p214 = scmp.eq.s32.totalorder %s24, 1
    %p215 = por %p213, %p214
    %p216 = scmp.ne.s32.totalorder %s207, %s208
    %p217 = scmp.eq.s32.totalorder %s24, 0
    %p218 = por %p216, %p217
    %p219 = scmp.ne.s32.totalorder %s207, %s208
    %p220 = scmp.eq.s32.totalorder %s25, 1
    %p221 = por %p219, %p220
    %p223 = scmp.ne.s32.totalorder %s208, %s222
    %p224 = scmp.eq.s32.totalorder %s25, 0
    %p225 = por %p223, %p224
    %s227 = sadd.s32 %s226, 1
    %p230 = scmp.eq.s32.totalorder %s19, 1
    %p231 = scmp.ne.s32.totalorder %s226, %s228
    %p232 = scmp.eq.s32.totalorder %s19, 0
    %p233 = por %p231, %p232
    %p234 = scmp.ne.s32.totalorder %s226, %s228
    %p235 = scmp.eq.s32.totalorder %s24, 1
    %p236 = por %p234, %p235
    %p237 = scmp.ne.s32.totalorder %s228, %s229
    %p238 = scmp.eq.s32.totalorder %s24, 0
    %p239 = por %p237, %p238
    %p240 = scmp.ne.s32.totalorder %s228, %s229
    %p241 = scmp.eq.s32.totalorder %s25, 1
    %p242 = por %p240, %p241
    %p244 = scmp.ne.s32.totalorder %s229, %s243
    %p245 = scmp.eq.s32.totalorder %s25, 0
    %p246 = por %p244, %p245
    %s247 = ssub.s32 %s19, %s26
    %p248 = scmp.eq.s32.totalorder %s247, 0
    %s250 = sadd.s32 %s249, 1
    %s251 = scalar_select %p248, %s249, %s250
    %p254 = pneg %p248
    %p255 = scmp.eq.s32.totalorder %s19, 1
    %p256 = por %p254, %p255
    %p257 = scmp.ne.s32.totalorder %s249, %s252
    %p258 = scmp.eq.s32.totalorder %s19, 0
    %p259 = por %p257, %p258
    %p260 = scmp.ne.s32.totalorder %s249, %s252
    %p261 = scmp.eq.s32.totalorder %s24, 1
    %p262 = por %p260, %p261
    %p263 = scmp.ne.s32.totalorder %s252, %s253
    %p264 = scmp.eq.s32.totalorder %s24, 0
    %p265 = por %p263, %p264
    %p266 = scmp.ne.s32.totalorder %s252, %s253
    %p267 = scmp.eq.s32.totalorder %s25, 1
    %p268 = por %p266, %p267
    %p270 = scmp.ne.s32.totalorder %s253, %s269
    %p271 = scmp.eq.s32.totalorder %s25, 0
    %p272 = por %p270, %p271
    %s273 = ssub.s32 %s19, %s26
    %p274 = scmp.eq.s32.totalorder %s273, 0
    %s276 = sadd.s32 %s275, 1
    %s277 = scalar_select %p274, %s275, %s276
    %p280 = pneg %p274
    %p281 = scmp.eq.s32.totalorder %s19, 1
    %p282 = por %p280, %p281
    %p283 = scmp.ne.s32.totalorder %s275, %s278
    %p284 = scmp.eq.s32.totalorder %s19, 0
    %p285 = por %p283, %p284
    %p286 = scmp.ne.s32.totalorder %s275, %s278
    %p287 = scmp.eq.s32.totalorder %s24, 1
    %p288 = por %p286, %p287
    %p289 = scmp.ne.s32.totalorder %s278, %s279
    %p290 = scmp.eq.s32.totalorder %s24, 0
    %p291 = por %p289, %p290
    %p292 = scmp.ne.s32.totalorder %s278, %s279
    %p293 = scmp.eq.s32.totalorder %s25, 1
    %p294 = por %p292, %p293
    %p296 = scmp.ne.s32.totalorder %s279, %s295
    %p297 = scmp.eq.s32.totalorder %s25, 0
    %p298 = por %p296, %p297
    %s299 = ssub.s32 %s19, %s26
    %p300 = scmp.eq.s32.totalorder %s299, 0
    %s302 = sadd.s32 %s301, 1
    %s303 = scalar_select %p300, %s301, %s302
    %p306 = pneg %p300
    %p307 = scmp.eq.s32.totalorder %s19, 1
    %p308 = por %p306, %p307
    %p309 = scmp.ne.s32.totalorder %s301, %s304
    %p310 = scmp.eq.s32.totalorder %s19, 0
    %p311 = por %p309, %p310
    %p312 = scmp.ne.s32.totalorder %s301, %s304
    %p313 = scmp.eq.s32.totalorder %s24, 1
    %p314 = por %p312, %p313
    %p315 = scmp.ne.s32.totalorder %s304, %s305
    %p316 = scmp.eq.s32.totalorder %s24, 0
    %p317 = por %p315, %p316
    %p318 = scmp.ne.s32.totalorder %s304, %s305
    %p319 = scmp.eq.s32.totalorder %s25, 1
    %p320 = por %p318, %p319
    %p322 = scmp.ne.s32.totalorder %s305, %s321
    %p323 = scmp.eq.s32.totalorder %s25, 0
    %p324 = por %p322, %p323
    %p325 = scmp.le.s32.totalorder 1, %s19
    %p326 = scmp.lt.s32.totalorder %s19, 3
    %p327 = pnand %p325, %p326
    %p328 = pneg %p327
    // Predicated region
    $region9: #{bgatt_forward.1} parent=5 // pred_check
      _
    $region10: #{bgatt_forward.1} parent=5 // pred_check_branch
      %330 = sbr.rel (%p327) target = $region12
    $region11: #{bgatt_forward.1} parent=5 // pred_region
      %s331 = ssub.s32 %s19, 1
      // Predicated region
      $region13: #{bgatt_forward.1} parent=11 // pred_check
        %p332 = pneg %p92
      $region14: #{bgatt_forward.1} parent=11 // pred_check_branch
        %334 = sbr.rel (%p332) target = $region16
      $region15: #{bgatt_forward.1} parent=11 // pred_region
        _
      $region16: #{bgatt_forward.1} parent=11 // pred_fallthru
        _
      // Predicated region
      $region17: #{bgatt_forward.1} parent=11 // pred_check
        %p335 = pneg %p113
      $region18: #{bgatt_forward.1} parent=11 // pred_check_branch
        %337 = sbr.rel (%p335) target = $region20
      $region19: #{bgatt_forward.1} parent=11 // pred_region
        _
      $region20: #{bgatt_forward.1} parent=11 // pred_fallthru
        _
      // Predicated region
      $region21: #{bgatt_forward.1} parent=11 // pred_check
        %p338 = pneg %p134
      $region22: #{bgatt_forward.1} parent=11 // pred_check_branch
        %340 = sbr.rel (%p338) target = $region24
      $region23: #{bgatt_forward.1} parent=11 // pred_region
        _
      $region24: #{bgatt_forward.1} parent=11 // pred_fallthru
        _
      // Predicated region
      $region25: #{bgatt_forward.1} parent=11 // pred_check
        %p341 = pneg %p155
      $region26: #{bgatt_forward.1} parent=11 // pred_check_branch
        %343 = sbr.rel (%p341) target = $region28
      $region27: #{bgatt_forward.1} parent=11 // pred_region
        _
      $region28: #{bgatt_forward.1} parent=11 // pred_fallthru
        _
      // Predicated region
      $region29: #{bgatt_forward.1} parent=11 // pred_check
        %p344 = pneg %p176
      $region30: #{bgatt_forward.1} parent=11 // pred_check_branch
        %346 = sbr.rel (%p344) target = $region32
      $region31: #{bgatt_forward.1} parent=11 // pred_region
        _
      $region32: #{bgatt_forward.1} parent=11 // pred_fallthru
        _
      // Predicated region
      $region33: #{bgatt_forward.1} parent=11 // pred_check
        %p347 = pneg %p197
      $region34: #{bgatt_forward.1} parent=11 // pred_check_branch
        %349 = sbr.rel (%p347) target = $region36
      $region35: #{bgatt_forward.1} parent=11 // pred_region
        _
      $region36: #{bgatt_forward.1} parent=11 // pred_fallthru
        _
      // Predicated region
      $region37: #{bgatt_forward.1} parent=11 // pred_check
        %p350 = pneg %p218
      $region38: #{bgatt_forward.1} parent=11 // pred_check_branch
        %352 = sbr.rel (%p350) target = $region40
      $region39: #{bgatt_forward.1} parent=11 // pred_region
        _
      $region40: #{bgatt_forward.1} parent=11 // pred_fallthru
        _
      // Predicated region
      $region41: #{bgatt_forward.1} parent=11 // pred_check
        %p353 = pneg %p239
      $region42: #{bgatt_forward.1} parent=11 // pred_check_branch
        %355 = sbr.rel (%p353) target = $region44
      $region43: #{bgatt_forward.1} parent=11 // pred_region
        _
      $region44: #{bgatt_forward.1} parent=11 // pred_fallthru
        _
    $region12: #{bgatt_forward.1} parent=5 // pred_fallthru
      _
    %p356 = scmp.lt.s32.totalorder %s19, 2
    // Predicated region
    $region45: #{bgatt_forward.1} parent=5 // pred_check
      %p357 = pneg %p356
    $region46: #{bgatt_forward.1} parent=5 // pred_check_branch
      %359 = sbr.rel (%p357) target = $region48
    $region47: #{bgatt_forward.1} parent=5 // pred_region
      // Predicated region
      $region49: #{bgatt_forward.1} parent=47 // pred_check
        %p360 = pneg %p39
      $region50: #{bgatt_forward.1} parent=47 // pred_check_branch
        %362 = sbr.rel (%p360) target = $region52
      $region51: #{bgatt_forward.1} parent=47 // pred_region
        %s363 = smul.u32 16, %s19
        %p364 = scmp.lt.s32.totalorder %s363, 31
        %s365 = scalar_select %p364, %s363, 31
        %s366 = smul.addr %s365, 8
        %s367 = scalar_lea.vmem %s0, %s366
        %s368 = smul.u32 16, %s19
      $region52: #{bgatt_forward.1} parent=47 // pred_fallthru
        _
      // Predicated region
      $region53: #{bgatt_forward.1} parent=47 // pred_check
        %p369 = pneg %p65
      $region54: #{bgatt_forward.1} parent=47 // pred_check_branch
        %371 = sbr.rel (%p369) target = $region56
      $region55: #{bgatt_forward.1} parent=47 // pred_region
        %s372 = smul.u32 16, %s19
        %p373 = scmp.lt.s32.totalorder %s372, 31
        %s374 = scalar_select %p373, %s372, 31
        %s375 = smul.addr %s374, 8
        %s376 = scalar_lea.vmem %s1, %s375
        %s377 = smul.u32 16, %s19
      $region56: #{bgatt_forward.1} parent=47 // pred_fallthru
        _
    $region48: #{bgatt_forward.1} parent=5 // pred_fallthru
      _
    %p378 = scmp.le.s32.totalorder 1, %s19
    %p379 = scmp.lt.s32.totalorder %s19, 3
    %p380 = pnand %p378, %p379
    %p381 = pneg %p380
    // Predicated region
    $region57: #{bgatt_forward.1} parent=5 // pred_check
      _
    $region58: #{bgatt_forward.1} parent=5 // pred_check_branch
      %383 = sbr.rel (%p380) target = $region60
    $region59: #{bgatt_forward.1} parent=5 // pred_region
      %s384 = ssub.s32 %s19, 1
      %s385 = smul.u32 16, %s24
      %p386 = scmp.lt.s32.totalorder %s385, 31
      %s387 = scalar_select %p386, %s385, 31
      %s388 = smul.addr %s387, 8
      %s389 = scalar_lea.vmem %s0, %s388
      %p390 = pneg %p45
      %p391 = pneg %p42
      %s392 = smul.u32 16, %s24
      %p393 = scmp.lt.s32.totalorder %s392, 31
      %s394 = scalar_select %p393, %s392, 31
      %s395 = smul.addr %s394, 8
      %s396 = scalar_lea.vmem %s1, %s395
      %p397 = pneg %p71
      %p398 = pneg %p68
      %p399 = pneg %p92
      %p400 = pneg %p89
      %p401 = pneg %p113
      %p402 = pneg %p110
      %p403 = pneg %p134
      %p404 = pneg %p131
      %p405 = pneg %p155
      %p406 = pneg %p152
      %p407 = pneg %p176
      %p408 = pneg %p173
      %p409 = pneg %p197
      %p410 = pneg %p194
      %p411 = pneg %p218
      %p412 = pneg %p215
      %p413 = pneg %p239
      %p414 = pneg %p236
      %p415 = pneg %p265
      %p416 = pneg %p262
      %s417 = smul.u32 2, %s24
      %p418 = scmp.lt.s32.totalorder %s417, 3
      %s419 = scalar_select %p418, %s417, 3
      %s420 = smul.addr %s419, 8
      %s421 = scalar_lea.vmem %s10, %s420
      %p422 = pneg %p291
      %p423 = pneg %p288
      %s424 = smul.u32 2, %s24
      %p425 = scmp.lt.s32.totalorder %s424, 3
      %s426 = scalar_select %p425, %s424, 3
      %s427 = smul.addr %s426, 8
      %s428 = scalar_lea.vmem %s11, %s427
      %p429 = pneg %p317
      %p430 = pneg %p314
      %s431 = smul.u32 2, %s24
      %p432 = scmp.lt.s32.totalorder %s431, 3
      %s433 = scalar_select %p432, %s431, 3
      %s434 = smul.addr %s433, 8
      %s435 = scalar_lea.vmem %s12, %s434
      %s436 = smul.u32 16, %s24
      %p437 = scmp.lt.s32.totalorder %s436, 31
      %s438 = scalar_select %p437, %s436, 31
      %s439 = smul.addr %s438, 8
      %s440 = scalar_lea.vmem %s0, %s439
      %s441 = smul.u32 16, %s24
      %s442 = smul.u32 16, %s24
      %p443 = scmp.lt.s32.totalorder %s442, 31
      %s444 = scalar_select %p443, %s442, 31
      %s445 = smul.addr %s444, 8
      %s446 = scalar_lea.vmem %s1, %s445
      %s447 = smul.u32 16, %s24
      %s448 = smul.u32 2, %s24
      %p449 = scmp.lt.s32.totalorder %s448, 3
      %s450 = scalar_select %p449, %s448, 3
      %s451 = smul.addr %s450, 8
      %s452 = scalar_lea.vmem %s10, %s451
      %s453 = smul.u32 2, %s24
      %s454 = smul.u32 2, %s24
      %p455 = scmp.lt.s32.totalorder %s454, 3
      %s456 = scalar_select %p455, %s454, 3
      %s457 = smul.addr %s456, 8
      %s458 = scalar_lea.vmem %s11, %s457
      %s459 = smul.u32 2, %s24
      %s460 = smul.u32 2, %s24
      %p461 = scmp.lt.s32.totalorder %s460, 3
      %s462 = scalar_select %p461, %s460, 3
      %s463 = smul.addr %s462, 8
      %s464 = scalar_lea.vmem %s12, %s463
      %s465 = smul.u32 2, %s24
      %v466 = vld [vmem:[%s440] sm:$0xff]
      %v467 = vld [vmem:[%s440 + $0x8] sm:$0xff]
      %v468 = vld [vmem:[%s440 + $0x10] sm:$0xff]
      %v469 = vld [vmem:[%s440 + $0x18] sm:$0xff]
      %v470 = vld [vmem:[%s440 + $0x20] sm:$0xff]
      %v471 = vld [vmem:[%s440 + $0x28] sm:$0xff]
      %v472 = vld [vmem:[%s440 + $0x30] sm:$0xff]
      %v473 = vld [vmem:[%s440 + $0x38] sm:$0xff]
      %v474 = vld [vmem:[%s440 + $0x40] sm:$0xff]
      %v475 = vld [vmem:[%s440 + $0x48] sm:$0xff]
      %v476 = vld [vmem:[%s440 + $0x50] sm:$0xff]
      %v477 = vld [vmem:[%s440 + $0x58] sm:$0xff]
      %v478 = vld [vmem:[%s440 + $0x60] sm:$0xff]
      %v479 = vld [vmem:[%s440 + $0x68] sm:$0xff]
      %v480 = vld [vmem:[%s440 + $0x70] sm:$0xff]
      %v481 = vld [vmem:[%s440 + $0x78] sm:$0xff]
      %v482 = vld [vmem:[%s446] sm:$0xff]
      %v483 = vld [vmem:[%s446 + $0x8] sm:$0xff]
      %v484 = vld [vmem:[%s446 + $0x10] sm:$0xff]
      %v485 = vld [vmem:[%s446 + $0x18] sm:$0xff]
      %v486 = vld [vmem:[%s446 + $0x20] sm:$0xff]
      %v487 = vld [vmem:[%s446 + $0x28] sm:$0xff]
      %v488 = vld [vmem:[%s446 + $0x30] sm:$0xff]
      %v489 = vld [vmem:[%s446 + $0x38] sm:$0xff]
      %v490 = vld [vmem:[%s446 + $0x40] sm:$0xff]
      %v491 = vld [vmem:[%s446 + $0x48] sm:$0xff]
      %v492 = vld [vmem:[%s446 + $0x50] sm:$0xff]
      %v493 = vld [vmem:[%s446 + $0x58] sm:$0xff]
      %v494 = vld [vmem:[%s446 + $0x60] sm:$0xff]
      %v495 = vld [vmem:[%s446 + $0x68] sm:$0xff]
      %v496 = vld [vmem:[%s446 + $0x70] sm:$0xff]
      %v497 = vld [vmem:[%s446 + $0x78] sm:$0xff]
      %v498 = vld [vmem:[%s2] sm:$0xff]
      %v499 = vld [vmem:[%s2 + $0x8] sm:$0xff]
      %v500 = vld [vmem:[%s3] sm:$0x1]
      %502 = vset.pattern.permute.xlu0 0
      %503 = vperm.xlu0 %502, %v482
      %v504 = vpop.permute.xlu0 %503
      %507 = vset.pattern.permute.xlu0 0
      %508 = vperm.xlu0 %507, %v483
      %v509 = vpop.permute.xlu0 %508
      %512 = vset.pattern.permute.xlu0 0
      %513 = vperm.xlu0 %512, %v484
      %v514 = vpop.permute.xlu0 %513
      %517 = vset.pattern.permute.xlu0 0
      %518 = vperm.xlu0 %517, %v485
      %v519 = vpop.permute.xlu0 %518
      %522 = vset.pattern.permute.xlu0 0
      %523 = vperm.xlu0 %522, %v486
      %v524 = vpop.permute.xlu0 %523
      %527 = vset.pattern.permute.xlu0 0
      %528 = vperm.xlu0 %527, %v487
      %v529 = vpop.permute.xlu0 %528
      %532 = vset.pattern.permute.xlu0 0
      %533 = vperm.xlu0 %532, %v488
      %v534 = vpop.permute.xlu0 %533
      %537 = vset.pattern.permute.xlu0 0
      %538 = vperm.xlu0 %537, %v489
      %v539 = vpop.permute.xlu0 %538
      %542 = vset.pattern.permute.xlu0 0
      %543 = vperm.xlu0 %542, %v490
      %v544 = vpop.permute.xlu0 %543
      %547 = vset.pattern.permute.xlu0 0
      %548 = vperm.xlu0 %547, %v491
      %v549 = vpop.permute.xlu0 %548
      %552 = vset.pattern.permute.xlu0 0
      %553 = vperm.xlu0 %552, %v492
      %v554 = vpop.permute.xlu0 %553
      %557 = vset.pattern.permute.xlu0 0
      %558 = vperm.xlu0 %557, %v493
      %v559 = vpop.permute.xlu0 %558
      %562 = vset.pattern.permute.xlu0 0
      %563 = vperm.xlu0 %562, %v494
      %v564 = vpop.permute.xlu0 %563
      %567 = vset.pattern.permute.xlu0 0
      %568 = vperm.xlu0 %567, %v495
      %v569 = vpop.permute.xlu0 %568
      %572 = vset.pattern.permute.xlu0 0
      %573 = vperm.xlu0 %572, %v496
      %v574 = vpop.permute.xlu0 %573
      %577 = vset.pattern.permute.xlu0 0
      %578 = vperm.xlu0 %577, %v497
      %v579 = vpop.permute.xlu0 %578
      %v582 = vlaneseq
      %v583 = vshrl.u32 %v582, 7
      %v584 = vsub.s32 0, %v583
      %v585 = vrot.slane %v500, %v584
      %v587 = vmul.f32 %v504, %v585
      %v588 = vmul.f32 %v509, %v585
      %v589 = vmul.f32 %v514, %v585
      %v590 = vmul.f32 %v519, %v585
      %v591 = vmul.f32 %v524, %v585
      %v592 = vmul.f32 %v529, %v585
      %v593 = vmul.f32 %v534, %v585
      %v594 = vmul.f32 %v539, %v585
      %v595 = vmul.f32 %v544, %v585
      %v596 = vmul.f32 %v549, %v585
      %v597 = vmul.f32 %v554, %v585
      %v598 = vmul.f32 %v559, %v585
      %v599 = vmul.f32 %v564, %v585
      %v600 = vmul.f32 %v569, %v585
      %v601 = vmul.f32 %v574, %v585
      %v602 = vmul.f32 %v579, %v585
      %vm603 = vcmask 130048
      %v605 = vsel %vm603, %v466, 0
      %v608 = vsel %vm603, %v467, 0
      %v611 = vsel %vm603, %v468, 0
      %v614 = vsel %vm603, %v469, 0
      %v617 = vsel %vm603, %v470, 0
      %v620 = vsel %vm603, %v471, 0
      %v623 = vsel %vm603, %v472, 0
      %v626 = vsel %vm603, %v473, 0
      %v629 = vsel %vm603, %v474, 0
      %v632 = vsel %vm603, %v475, 0
      %v635 = vsel %vm603, %v476, 0
      %v638 = vsel %vm603, %v477, 0
      %v641 = vsel %vm603, %v478, 0
      %v644 = vsel %vm603, %v479, 0
      %v647 = vsel %vm603, %v480, 0
      %v650 = vsel %vm603, %v481, 0
      %652 = vmatprep.subr.mxu0 0.0
      %653 = vmatpush1.msra.mxu0 0.0
      %654 = vmatprep.subr.mxu0 0.0
      %655 = vmatpush1.msra.mxu0 0.0
      %656 = vmatprep.subr.mxu0 0.0
      %657 = vmatpush1.msra.mxu0 0.0
      %658 = vmatprep.subr.mxu0 0.0
      %659 = vmatpush1.msra.mxu0 0.0
      %660 = vmatprep.subr.mxu0 0.0
      %661 = vmatpush1.msra.mxu0 0.0
      %662 = vmatprep.subr.mxu0 0.0
      %663 = vmatpush1.msra.mxu0 0.0
      %664 = vmatprep.subr.mxu0 0.0
      %665 = vmatpush1.msra.mxu0 0.0
      %666 = vmatprep.subr.mxu0 0.0
      %667 = vmatpush1.msra.mxu0 0.0
      %668 = vmatprep.subr.mxu0 0.0
      %669 = vmatpush1.msra.mxu0 0.0
      %670 = vmatprep.subr.mxu0 0.0
      %671 = vmatpush1.msra.mxu0 0.0
      %672 = vmatprep.subr.mxu0 0.0
      %673 = vmatpush1.msra.mxu0 0.0
      %674 = vmatprep.subr.mxu0 0.0
      %675 = vmatpush1.msra.mxu0 0.0
      %676 = vmatprep.subr.mxu0 0.0
      %677 = vmatpush1.msra.mxu0 0.0
      %678 = vmatprep.subr.mxu0 0.0
      %679 = vmatpush1.msra.mxu0 0.0
      %680 = vmatprep.subr.mxu0 0.0
      %681 = vmatpush1.msra.mxu0 %v499
      %682 = vmatprep.subr.mxu0 0.0
      %683 = vmatpush1.msra.mxu0 %v498
      %684 = vmatprep.subr.mxu0 0.0
      %685 = vmatpush2.msra.mxu0 0.0
      %686 = vmatprep.subr.mxu0 0.0
      %687 = vmatpush2.msra.mxu0 0.0
      %688 = vmatprep.subr.mxu0 0.0
      %689 = vmatpush2.msra.mxu0 0.0
      %690 = vmatprep.subr.mxu0 0.0
      %691 = vmatpush2.msra.mxu0 0.0
      %692 = vmatprep.subr.mxu0 0.0
      %693 = vmatpush2.msra.mxu0 0.0
      %694 = vmatprep.subr.mxu0 0.0
      %695 = vmatpush2.msra.mxu0 0.0
      %696 = vmatprep.subr.mxu0 0.0
      %697 = vmatpush2.msra.mxu0 0.0
      %698 = vmatprep.subr.mxu0 0.0
      %699 = vmatpush2.msra.mxu0 0.0
      %700 = vmatprep.subr.mxu0 0.0
      %701 = vmatpush2.msra.mxu0 0.0
      %702 = vmatprep.subr.mxu0 0.0
      %703 = vmatpush2.msra.mxu0 0.0
      %704 = vmatprep.subr.mxu0 0.0
      %705 = vmatpush2.msra.mxu0 0.0
      %706 = vmatprep.subr.mxu0 0.0
      %707 = vmatpush2.msra.mxu0 0.0
      %708 = vmatprep.subr.mxu0 0.0
      %709 = vmatpush2.msra.mxu0 0.0
      %710 = vmatprep.subr.mxu0 0.0
      %711 = vmatpush2.msra.mxu0 0.0
      %712 = vmatprep.subr.mxu0 0.0
      %713 = vmatpush2.msra.mxu0 0.0
      %714 = vmatprep.subr.mxu0 0.0
      %715 = vmatpush2.msra.mxu0 0.0
      %716 = vmatprep.mubr.f32.mxu0 0.0
      %717 = vmatmul.mubr.f32.gmra.mxu0 %v605
      %v718 = vpop.f32.mrf.mxu0
      %v719 = vadd.f32 %v587, %v718
      %v720 = vpop.f32.mrf.mxu0
      %721 = vmatprep.mubr.f32.mxu0 0.0
      %722 = vmatmul.mubr.f32.gmra.mxu0 %v608
      %v723 = vpop.f32.mrf.mxu0
      %v724 = vadd.f32 %v588, %v723
      %v725 = vpop.f32.mrf.mxu0
      %726 = vmatprep.mubr.f32.mxu0 0.0
      %727 = vmatmul.mubr.f32.gmra.mxu0 %v611
      %v728 = vpop.f32.mrf.mxu0
      %v729 = vadd.f32 %v589, %v728
      %v730 = vpop.f32.mrf.mxu0
      %731 = vmatprep.mubr.f32.mxu0 0.0
      %732 = vmatmul.mubr.f32.gmra.mxu0 %v614
      %v733 = vpop.f32.mrf.mxu0
      %v734 = vadd.f32 %v590, %v733
      %v735 = vpop.f32.mrf.mxu0
      %736 = vmatprep.mubr.f32.mxu0 0.0
      %737 = vmatmul.mubr.f32.gmra.mxu0 %v617
      %v738 = vpop.f32.mrf.mxu0
      %v739 = vadd.f32 %v591, %v738
      %v740 = vpop.f32.mrf.mxu0
      %741 = vmatprep.mubr.f32.mxu0 0.0
      %742 = vmatmul.mubr.f32.gmra.mxu0 %v620
      %v743 = vpop.f32.mrf.mxu0
      %v744 = vadd.f32 %v592, %v743
      %v745 = vpop.f32.mrf.mxu0
      %746 = vmatprep.mubr.f32.mxu0 0.0
      %747 = vmatmul.mubr.f32.gmra.mxu0 %v623
      %v748 = vpop.f32.mrf.mxu0
      %v749 = vadd.f32 %v593, %v748
      %v750 = vpop.f32.mrf.mxu0
      %751 = vmatprep.mubr.f32.mxu0 0.0
      %752 = vmatmul.mubr.f32.gmra.mxu0 %v626
      %v753 = vpop.f32.mrf.mxu0
      %v754 = vadd.f32 %v594, %v753
      %v755 = vpop.f32.mrf.mxu0
      %756 = vmatprep.mubr.f32.mxu0 0.0
      %757 = vmatmul.mubr.f32.gmra.mxu0 %v629
      %v758 = vpop.f32.mrf.mxu0
      %v759 = vadd.f32 %v595, %v758
      %v760 = vpop.f32.mrf.mxu0
      %761 = vmatprep.mubr.f32.mxu0 0.0
      %762 = vmatmul.mubr.f32.gmra.mxu0 %v632
      %v763 = vpop.f32.mrf.mxu0
      %v764 = vadd.f32 %v596, %v763
      %v765 = vpop.f32.mrf.mxu0
      %766 = vmatprep.mubr.f32.mxu0 0.0
      %767 = vmatmul.mubr.f32.gmra.mxu0 %v635
      %v768 = vpop.f32.mrf.mxu0
      %v769 = vadd.f32 %v597, %v768
      %v770 = vpop.f32.mrf.mxu0
      %771 = vmatprep.mubr.f32.mxu0 0.0
      %772 = vmatmul.mubr.f32.gmra.mxu0 %v638
      %v773 = vpop.f32.mrf.mxu0
      %v774 = vadd.f32 %v598, %v773
      %v775 = vpop.f32.mrf.mxu0
      %776 = vmatprep.mubr.f32.mxu0 0.0
      %777 = vmatmul.mubr.f32.gmra.mxu0 %v641
      %v778 = vpop.f32.mrf.mxu0
      %v779 = vadd.f32 %v599, %v778
      %v780 = vpop.f32.mrf.mxu0
      %781 = vmatprep.mubr.f32.mxu0 0.0
      %782 = vmatmul.mubr.f32.gmra.mxu0 %v644
      %v783 = vpop.f32.mrf.mxu0
      %v784 = vadd.f32 %v600, %v783
      %v785 = vpop.f32.mrf.mxu0
      %786 = vmatprep.mubr.f32.mxu0 0.0
      %787 = vmatmul.mubr.f32.gmra.mxu0 %v647
      %v788 = vpop.f32.mrf.mxu0
      %v789 = vadd.f32 %v601, %v788
      %v790 = vpop.f32.mrf.mxu0
      %791 = vmatprep.mubr.f32.mxu0 0.0
      %792 = vmatmul.mubr.f32.gmra.mxu0 %v650
      %v793 = vpop.f32.mrf.mxu0
      %v794 = vadd.f32 %v602, %v793
      %v795 = vpop.f32.mrf.mxu0
      %796 = vdwg.mxu0
      %v797 = vld [vmem:[%s4] sm:$0x1]
      %v799 = vlaneseq
      %v800 = vshrl.u32 %v799, 7
      %v801 = vsub.s32 0, %v800
      %v802 = vrot.slane %v797, %v801
      %v804 = vadd.f32 %v719, %v802
      %v805 = vadd.f32 %v724, %v802
      %v806 = vadd.f32 %v729, %v802
      %v807 = vadd.f32 %v734, %v802
      %v808 = vadd.f32 %v739, %v802
      %v809 = vadd.f32 %v744, %v802
      %v810 = vadd.f32 %v749, %v802
      %v811 = vadd.f32 %v754, %v802
      %v812 = vadd.f32 %v759, %v802
      %v813 = vadd.f32 %v764, %v802
      %v814 = vadd.f32 %v769, %v802
      %v815 = vadd.f32 %v774, %v802
      %v816 = vadd.f32 %v779, %v802
      %v817 = vadd.f32 %v784, %v802
      %v818 = vadd.f32 %v789, %v802
      %v819 = vadd.f32 %v794, %v802
      %v820 = vld [vmem:[%s5] sm:$0xff]
      %v821 = vld [vmem:[%s5 + $0x8] sm:$0xff]
      %v822 = vld [vmem:[%s5 + $0x10] sm:$0xff]
      %v823 = vld [vmem:[%s5 + $0x18] sm:$0xff]
      %vm824 = vcmask 261120
      %v826 = vsel %vm824, %v804, 0
      %v829 = vsel %vm824, %v805, 0
      %v832 = vsel %vm824, %v806, 0
      %v835 = vsel %vm824, %v807, 0
      %v838 = vsel %vm824, %v808, 0
      %v841 = vsel %vm824, %v809, 0
      %v844 = vsel %vm824, %v810, 0
      %v847 = vsel %vm824, %v811, 0
      %v850 = vsel %vm824, %v812, 0
      %v853 = vsel %vm824, %v813, 0
      %v856 = vsel %vm824, %v814, 0
      %v859 = vsel %vm824, %v815, 0
      %v862 = vsel %vm824, %v816, 0
      %v865 = vsel %vm824, %v817, 0
      %v868 = vsel %vm824, %v818, 0
      %v871 = vsel %vm824, %v819, 0
      %873 = vmatprep.subr.mxu0 0.0
      %874 = vmatpush1.msra.mxu0 0.0
      %875 = vmatprep.subr.mxu0 0.0
      %876 = vmatpush1.msra.mxu0 0.0
      %877 = vmatprep.subr.mxu0 0.0
      %878 = vmatpush1.msra.mxu0 0.0
      %879 = vmatprep.subr.mxu0 0.0
      %880 = vmatpush1.msra.mxu0 0.0
      %881 = vmatprep.subr.mxu0 0.0
      %882 = vmatpush1.msra.mxu0 0.0
      %883 = vmatprep.subr.mxu0 0.0
      %884 = vmatpush1.msra.mxu0 0.0
      %885 = vmatprep.subr.mxu0 0.0
      %886 = vmatpush1.msra.mxu0 0.0
      %887 = vmatprep.subr.mxu0 0.0
      %888 = vmatpush1.msra.mxu0 0.0
      %889 = vmatprep.subr.mxu0 0.0
      %890 = vmatpush1.msra.mxu0 0.0
      %891 = vmatprep.subr.mxu0 0.0
      %892 = vmatpush1.msra.mxu0 0.0
      %893 = vmatprep.subr.mxu0 0.0
      %894 = vmatpush1.msra.mxu0 0.0
      %895 = vmatprep.subr.mxu0 0.0
      %896 = vmatpush1.msra.mxu0 0.0
      %897 = vmatprep.subr.mxu0 0.0
      %898 = vmatpush1.msra.mxu0 %v823
      %899 = vmatprep.subr.mxu0 0.0
      %900 = vmatpush1.msra.mxu0 %v822
      %901 = vmatprep.subr.mxu0 0.0
      %902 = vmatpush1.msra.mxu0 %v821
      %903 = vmatprep.subr.mxu0 0.0
      %904 = vmatpush1.msra.mxu0 %v820
      %905 = vmatprep.subr.mxu0 0.0
      %906 = vmatpush2.msra.mxu0 0.0
      %907 = vmatprep.subr.mxu0 0.0
      %908 = vmatpush2.msra.mxu0 0.0
      %909 = vmatprep.subr.mxu0 0.0
      %910 = vmatpush2.msra.mxu0 0.0
      %911 = vmatprep.subr.mxu0 0.0
      %912 = vmatpush2.msra.mxu0 0.0
      %913 = vmatprep.subr.mxu0 0.0
      %914 = vmatpush2.msra.mxu0 0.0
      %915 = vmatprep.subr.mxu0 0.0
      %916 = vmatpush2.msra.mxu0 0.0
      %917 = vmatprep.subr.mxu0 0.0
      %918 = vmatpush2.msra.mxu0 0.0
      %919 = vmatprep.subr.mxu0 0.0
      %920 = vmatpush2.msra.mxu0 0.0
      %921 = vmatprep.subr.mxu0 0.0
      %922 = vmatpush2.msra.mxu0 0.0
      %923 = vmatprep.subr.mxu0 0.0
      %924 = vmatpush2.msra.mxu0 0.0
      %925 = vmatprep.subr.mxu0 0.0
      %926 = vmatpush2.msra.mxu0 0.0
      %927 = vmatprep.subr.mxu0 0.0
      %928 = vmatpush2.msra.mxu0 0.0
      %929 = vmatprep.subr.mxu0 0.0
      %930 = vmatpush2.msra.mxu0 0.0
      %931 = vmatprep.subr.mxu0 0.0
      %932 = vmatpush2.msra.mxu0 0.0
      %933 = vmatprep.subr.mxu0 0.0
      %934 = vmatpush2.msra.mxu0 0.0
      %935 = vmatprep.subr.mxu0 0.0
      %936 = vmatpush2.msra.mxu0 0.0
      %937 = vmatprep.mubr.f32.mxu0 0.0
      %938 = vmatmul.mubr.f32.gmra.mxu0 %v826
      %v939 = vpop.f32.mrf.mxu0
      %v940 = vadd.f32 0.0, %v939
      %v941 = vpop.f32.mrf.mxu0
      %942 = vmatprep.mubr.f32.mxu0 0.0
      %943 = vmatmul.mubr.f32.gmra.mxu0 %v829
      %v944 = vpop.f32.mrf.mxu0
      %v945 = vadd.f32 0.0, %v944
      %v946 = vpop.f32.mrf.mxu0
      %947 = vmatprep.mubr.f32.mxu0 0.0
      %948 = vmatmul.mubr.f32.gmra.mxu0 %v832
      %v949 = vpop.f32.mrf.mxu0
      %v950 = vadd.f32 0.0, %v949
      %v951 = vpop.f32.mrf.mxu0
      %952 = vmatprep.mubr.f32.mxu0 0.0
      %953 = vmatmul.mubr.f32.gmra.mxu0 %v835
      %v954 = vpop.f32.mrf.mxu0
      %v955 = vadd.f32 0.0, %v954
      %v956 = vpop.f32.mrf.mxu0
      %957 = vmatprep.mubr.f32.mxu0 0.0
      %958 = vmatmul.mubr.f32.gmra.mxu0 %v838
      %v959 = vpop.f32.mrf.mxu0
      %v960 = vadd.f32 0.0, %v959
      %v961 = vpop.f32.mrf.mxu0
      %962 = vmatprep.mubr.f32.mxu0 0.0
      %963 = vmatmul.mubr.f32.gmra.mxu0 %v841
      %v964 = vpop.f32.mrf.mxu0
      %v965 = vadd.f32 0.0, %v964
      %v966 = vpop.f32.mrf.mxu0
      %967 = vmatprep.mubr.f32.mxu0 0.0
      %968 = vmatmul.mubr.f32.gmra.mxu0 %v844
      %v969 = vpop.f32.mrf.mxu0
      %v970 = vadd.f32 0.0, %v969
      %v971 = vpop.f32.mrf.mxu0
      %972 = vmatprep.mubr.f32.mxu0 0.0
      %973 = vmatmul.mubr.f32.gmra.mxu0 %v847
      %v974 = vpop.f32.mrf.mxu0
      %v975 = vadd.f32 0.0, %v974
      %v976 = vpop.f32.mrf.mxu0
      %977 = vmatprep.mubr.f32.mxu0 0.0
      %978 = vmatmul.mubr.f32.gmra.mxu0 %v850
      %v979 = vpop.f32.mrf.mxu0
      %v980 = vadd.f32 0.0, %v979
      %v981 = vpop.f32.mrf.mxu0
      %982 = vmatprep.mubr.f32.mxu0 0.0
      %983 = vmatmul.mubr.f32.gmra.mxu0 %v853
      %v984 = vpop.f32.mrf.mxu0
      %v985 = vadd.f32 0.0, %v984
      %v986 = vpop.f32.mrf.mxu0
      %987 = vmatprep.mubr.f32.mxu0 0.0
      %988 = vmatmul.mubr.f32.gmra.mxu0 %v856
      %v989 = vpop.f32.mrf.mxu0
      %v990 = vadd.f32 0.0, %v989
      %v991 = vpop.f32.mrf.mxu0
      %992 = vmatprep.mubr.f32.mxu0 0.0
      %993 = vmatmul.mubr.f32.gmra.mxu0 %v859
      %v994 = vpop.f32.mrf.mxu0
      %v995 = vadd.f32 0.0, %v994
      %v996 = vpop.f32.mrf.mxu0
      %997 = vmatprep.mubr.f32.mxu0 0.0
      %998 = vmatmul.mubr.f32.gmra.mxu0 %v862
      %v999 = vpop.f32.mrf.mxu0
      %v1000 = vadd.f32 0.0, %v999
      %v1001 = vpop.f32.mrf.mxu0
      %1002 = vmatprep.mubr.f32.mxu0 0.0
      %1003 = vmatmul.mubr.f32.gmra.mxu0 %v865
      %v1004 = vpop.f32.mrf.mxu0
      %v1005 = vadd.f32 0.0, %v1004
      %v1006 = vpop.f32.mrf.mxu0
      %1007 = vmatprep.mubr.f32.mxu0 0.0
      %1008 = vmatmul.mubr.f32.gmra.mxu0 %v868
      %v1009 = vpop.f32.mrf.mxu0
      %v1010 = vadd.f32 0.0, %v1009
      %v1011 = vpop.f32.mrf.mxu0
      %1012 = vmatprep.mubr.f32.mxu0 0.0
      %1013 = vmatmul.mubr.f32.gmra.mxu0 %v871
      %v1014 = vpop.f32.mrf.mxu0
      %v1015 = vadd.f32 0.0, %v1014
      %v1016 = vpop.f32.mrf.mxu0
      %1017 = vdwg.mxu0
      %vm1018 = vcmask 31744
      %v1019 = vsel %vm1018, %v940, -inf
      %1020 = vmax.xlane.f32.xlu0 %v1019
      %v1021 = vpop.xlane.xlu0 %1020
      %v1022 = vsel %vm1018, %v945, -inf
      %1023 = vmax.xlane.f32.xlu0 %v1022
      %v1024 = vpop.xlane.xlu0 %1023
      %v1025 = vsel %vm1018, %v950, -inf
      %1026 = vmax.xlane.f32.xlu0 %v1025
      %v1027 = vpop.xlane.xlu0 %1026
      %v1028 = vsel %vm1018, %v955, -inf
      %1029 = vmax.xlane.f32.xlu0 %v1028
      %v1030 = vpop.xlane.xlu0 %1029
      %v1031 = vsel %vm1018, %v960, -inf
      %1032 = vmax.xlane.f32.xlu0 %v1031
      %v1033 = vpop.xlane.xlu0 %1032
      %v1034 = vsel %vm1018, %v965, -inf
      %1035 = vmax.xlane.f32.xlu0 %v1034
      %v1036 = vpop.xlane.xlu0 %1035
      %v1037 = vsel %vm1018, %v970, -inf
      %1038 = vmax.xlane.f32.xlu0 %v1037
      %v1039 = vpop.xlane.xlu0 %1038
      %v1040 = vsel %vm1018, %v975, -inf
      %1041 = vmax.xlane.f32.xlu0 %v1040
      %v1042 = vpop.xlane.xlu0 %1041
      %v1043 = vsel %vm1018, %v980, -inf
      %1044 = vmax.xlane.f32.xlu0 %v1043
      %v1045 = vpop.xlane.xlu0 %1044
      %v1046 = vsel %vm1018, %v985, -inf
      %1047 = vmax.xlane.f32.xlu0 %v1046
      %v1048 = vpop.xlane.xlu0 %1047
      %v1049 = vsel %vm1018, %v990, -inf
      %1050 = vmax.xlane.f32.xlu0 %v1049
      %v1051 = vpop.xlane.xlu0 %1050
      %v1052 = vsel %vm1018, %v995, -inf
      %1053 = vmax.xlane.f32.xlu0 %v1052
      %v1054 = vpop.xlane.xlu0 %1053
      %v1055 = vsel %vm1018, %v1000, -inf
      %1056 = vmax.xlane.f32.xlu0 %v1055
      %v1057 = vpop.xlane.xlu0 %1056
      %v1058 = vsel %vm1018, %v1005, -inf
      %1059 = vmax.xlane.f32.xlu0 %v1058
      %v1060 = vpop.xlane.xlu0 %1059
      %v1061 = vsel %vm1018, %v1010, -inf
      %1062 = vmax.xlane.f32.xlu0 %v1061
      %v1063 = vpop.xlane.xlu0 %1062
      %v1064 = vsel %vm1018, %v1015, -inf
      %1065 = vmax.xlane.f32.xlu0 %v1064
      %v1066 = vpop.xlane.xlu0 %1065
      %v1067 = vsub.f32 %v940, %v1021
      %v1068 = vsub.f32 %v945, %v1024
      %v1069 = vsub.f32 %v950, %v1027
      %v1070 = vsub.f32 %v955, %v1030
      %v1071 = vsub.f32 %v960, %v1033
      %v1072 = vsub.f32 %v965, %v1036
      %v1073 = vsub.f32 %v970, %v1039
      %v1074 = vsub.f32 %v975, %v1042
      %v1075 = vsub.f32 %v980, %v1045
      %v1076 = vsub.f32 %v985, %v1048
      %v1077 = vsub.f32 %v990, %v1051
      %v1078 = vsub.f32 %v995, %v1054
      %v1079 = vsub.f32 %v1000, %v1057
      %v1080 = vsub.f32 %v1005, %v1060
      %v1081 = vsub.f32 %v1010, %v1063
      %v1082 = vsub.f32 %v1015, %v1066
      %v1083 = vmul.f32 %v1067, 1.442695
      %v1084 = vpow.pop %v1083
      %v1085 = vmul.f32 %v1068, 1.442695
      %v1086 = vpow.pop %v1085
      %v1087 = vmul.f32 %v1069, 1.442695
      %v1088 = vpow.pop %v1087
      %v1089 = vmul.f32 %v1070, 1.442695
      %v1090 = vpow.pop %v1089
      %v1091 = vmul.f32 %v1071, 1.442695
      %v1092 = vpow.pop %v1091
      %v1093 = vmul.f32 %v1072, 1.442695
      %v1094 = vpow.pop %v1093
      %v1095 = vmul.f32 %v1073, 1.442695
      %v1096 = vpow.pop %v1095
      %v1097 = vmul.f32 %v1074, 1.442695
      %v1098 = vpow.pop %v1097
      %v1099 = vmul.f32 %v1075, 1.442695
      %v1100 = vpow.pop %v1099
      %v1101 = vmul.f32 %v1076, 1.442695
      %v1102 = vpow.pop %v1101
      %v1103 = vmul.f32 %v1077, 1.442695
      %v1104 = vpow.pop %v1103
      %v1105 = vmul.f32 %v1078, 1.442695
      %v1106 = vpow.pop %v1105
      %v1107 = vmul.f32 %v1079, 1.442695
      %v1108 = vpow.pop %v1107
      %v1109 = vmul.f32 %v1080, 1.442695
      %v1110 = vpow.pop %v1109
      %v1111 = vmul.f32 %v1081, 1.442695
      %v1112 = vpow.pop %v1111
      %v1113 = vmul.f32 %v1082, 1.442695
      %v1114 = vpow.pop %v1113
      %v1115 = vsel %vm1018, %v1084, 0.0
      %1116 = vadd.xlane.f32.xlu0 %v1115
      %v1117 = vpop.xlane.xlu0 %1116
      %v1118 = vsel %vm1018, %v1086, 0.0
      %1119 = vadd.xlane.f32.xlu0 %v1118
      %v1120 = vpop.xlane.xlu0 %1119
      %v1121 = vsel %vm1018, %v1088, 0.0
      %1122 = vadd.xlane.f32.xlu0 %v1121
      %v1123 = vpop.xlane.xlu0 %1122
      %v1124 = vsel %vm1018, %v1090, 0.0
      %1125 = vadd.xlane.f32.xlu0 %v1124
      %v1126 = vpop.xlane.xlu0 %1125
      %v1127 = vsel %vm1018, %v1092, 0.0
      %1128 = vadd.xlane.f32.xlu0 %v1127
      %v1129 = vpop.xlane.xlu0 %1128
      %v1130 = vsel %vm1018, %v1094, 0.0
      %1131 = vadd.xlane.f32.xlu0 %v1130
      %v1132 = vpop.xlane.xlu0 %1131
      %v1133 = vsel %vm1018, %v1096, 0.0
      %1134 = vadd.xlane.f32.xlu0 %v1133
      %v1135 = vpop.xlane.xlu0 %1134
      %v1136 = vsel %vm1018, %v1098, 0.0
      %1137 = vadd.xlane.f32.xlu0 %v1136
      %v1138 = vpop.xlane.xlu0 %1137
      %v1139 = vsel %vm1018, %v1100, 0.0
      %1140 = vadd.xlane.f32.xlu0 %v1139
      %v1141 = vpop.xlane.xlu0 %1140
      %v1142 = vsel %vm1018, %v1102, 0.0
      %1143 = vadd.xlane.f32.xlu0 %v1142
      %v1144 = vpop.xlane.xlu0 %1143
      %v1145 = vsel %vm1018, %v1104, 0.0
      %1146 = vadd.xlane.f32.xlu0 %v1145
      %v1147 = vpop.xlane.xlu0 %1146
      %v1148 = vsel %vm1018, %v1106, 0.0
      %1149 = vadd.xlane.f32.xlu0 %v1148
      %v1150 = vpop.xlane.xlu0 %1149
      %v1151 = vsel %vm1018, %v1108, 0.0
      %1152 = vadd.xlane.f32.xlu0 %v1151
      %v1153 = vpop.xlane.xlu0 %1152
      %v1154 = vsel %vm1018, %v1110, 0.0
      %1155 = vadd.xlane.f32.xlu0 %v1154
      %v1156 = vpop.xlane.xlu0 %1155
      %v1157 = vsel %vm1018, %v1112, 0.0
      %1158 = vadd.xlane.f32.xlu0 %v1157
      %v1159 = vpop.xlane.xlu0 %1158
      %v1160 = vsel %vm1018, %v1114, 0.0
      %1161 = vadd.xlane.f32.xlu0 %v1160
      %v1162 = vpop.xlane.xlu0 %1161
      %v1163 = vrcp.pop %v1117
      %v1164 = vrcp.pop %v1120
      %v1165 = vrcp.pop %v1123
      %v1166 = vrcp.pop %v1126
      %v1167 = vrcp.pop %v1129
      %v1168 = vrcp.pop %v1132
      %v1169 = vrcp.pop %v1135
      %v1170 = vrcp.pop %v1138
      %v1171 = vrcp.pop %v1141
      %v1172 = vrcp.pop %v1144
      %v1173 = vrcp.pop %v1147
      %v1174 = vrcp.pop %v1150
      %v1175 = vrcp.pop %v1153
      %v1176 = vrcp.pop %v1156
      %v1177 = vrcp.pop %v1159
      %v1178 = vrcp.pop %v1162
      %v1179 = vmul.f32 %v1084, %v1163
      %v1180 = vmul.f32 %v1086, %v1164
      %v1181 = vmul.f32 %v1088, %v1165
      %v1182 = vmul.f32 %v1090, %v1166
      %v1183 = vmul.f32 %v1092, %v1167
      %v1184 = vmul.f32 %v1094, %v1168
      %v1185 = vmul.f32 %v1096, %v1169
      %v1186 = vmul.f32 %v1098, %v1170
      %v1187 = vmul.f32 %v1100, %v1171
      %v1188 = vmul.f32 %v1102, %v1172
      %v1189 = vmul.f32 %v1104, %v1173
      %v1190 = vmul.f32 %v1106, %v1174
      %v1191 = vmul.f32 %v1108, %v1175
      %v1192 = vmul.f32 %v1110, %v1176
      %v1193 = vmul.f32 %v1112, %v1177
      %v1194 = vmul.f32 %v1114, %v1178
      %v1195 = vld [vmem:[%s6] sm:$0xff]
      %v1196 = vld [vmem:[%s6 + $0x8] sm:$0xff]
      %v1197 = vld [vmem:[%s6 + $0x10] sm:$0xff]
      %v1198 = vld [vmem:[%s6 + $0x18] sm:$0xff]
      %v1199 = vld [vmem:[%s7] sm:$0x1]
      %1201 = vset.pattern.permute.xlu0 0
      %1202 = vperm.xlu0 %1201, %v1179
      %v1203 = vpop.permute.xlu0 %1202
      %1206 = vset.pattern.permute.xlu0 0
      %1207 = vperm.xlu0 %1206, %v1180
      %v1208 = vpop.permute.xlu0 %1207
      %1211 = vset.pattern.permute.xlu0 0
      %1212 = vperm.xlu0 %1211, %v1181
      %v1213 = vpop.permute.xlu0 %1212
      %1216 = vset.pattern.permute.xlu0 0
      %1217 = vperm.xlu0 %1216, %v1182
      %v1218 = vpop.permute.xlu0 %1217
      %1221 = vset.pattern.permute.xlu0 0
      %1222 = vperm.xlu0 %1221, %v1183
      %v1223 = vpop.permute.xlu0 %1222
      %1226 = vset.pattern.permute.xlu0 0
      %1227 = vperm.xlu0 %1226, %v1184
      %v1228 = vpop.permute.xlu0 %1227
      %1231 = vset.pattern.permute.xlu0 0
      %1232 = vperm.xlu0 %1231, %v1185
      %v1233 = vpop.permute.xlu0 %1232
      %1236 = vset.pattern.permute.xlu0 0
      %1237 = vperm.xlu0 %1236, %v1186
      %v1238 = vpop.permute.xlu0 %1237
      %1241 = vset.pattern.permute.xlu0 0
      %1242 = vperm.xlu0 %1241, %v1187
      %v1243 = vpop.permute.xlu0 %1242
      %1246 = vset.pattern.permute.xlu0 0
      %1247 = vperm.xlu0 %1246, %v1188
      %v1248 = vpop.permute.xlu0 %1247
      %1251 = vset.pattern.permute.xlu0 0
      %1252 = vperm.xlu0 %1251, %v1189
      %v1253 = vpop.permute.xlu0 %1252
      %1256 = vset.pattern.permute.xlu0 0
      %1257 = vperm.xlu0 %1256, %v1190
      %v1258 = vpop.permute.xlu0 %1257
      %1261 = vset.pattern.permute.xlu0 0
      %1262 = vperm.xlu0 %1261, %v1191
      %v1263 = vpop.permute.xlu0 %1262
      %1266 = vset.pattern.permute.xlu0 0
      %1267 = vperm.xlu0 %1266, %v1192
      %v1268 = vpop.permute.xlu0 %1267
      %1271 = vset.pattern.permute.xlu0 0
      %1272 = vperm.xlu0 %1271, %v1193
      %v1273 = vpop.permute.xlu0 %1272
      %1276 = vset.pattern.permute.xlu0 0
      %1277 = vperm.xlu0 %1276, %v1194
      %v1278 = vpop.permute.xlu0 %1277
      %v1280 = vmul.f32 %v1203, %v804
      %v1281 = vmul.f32 %v1208, %v805
      %v1282 = vmul.f32 %v1213, %v806
      %v1283 = vmul.f32 %v1218, %v807
      %v1284 = vmul.f32 %v1223, %v808
      %v1285 = vmul.f32 %v1228, %v809
      %v1286 = vmul.f32 %v1233, %v810
      %v1287 = vmul.f32 %v1238, %v811
      %v1288 = vmul.f32 %v1243, %v812
      %v1289 = vmul.f32 %v1248, %v813
      %v1290 = vmul.f32 %v1253, %v814
      %v1291 = vmul.f32 %v1258, %v815
      %v1292 = vmul.f32 %v1263, %v816
      %v1293 = vmul.f32 %v1268, %v817
      %v1294 = vmul.f32 %v1273, %v818
      %v1295 = vmul.f32 %v1278, %v819
      %v1296 = vsel %vm824, %v1280, 0.0
      %v1297 = vrot.slane %v1296, 4
      %v1298 = vadd.f32 %v1296, %v1297
      %v1299 = vrot.slane %v1298, 2
      %v1300 = vadd.f32 %v1298, %v1299
      %v1301 = vrot.slane %v1300, 1
      %v1302 = vadd.f32 %v1300, %v1301
      %v1303 = vsel %vm824, %v1281, 0.0
      %v1304 = vrot.slane %v1303, 4
      %v1305 = vadd.f32 %v1303, %v1304
      %v1306 = vrot.slane %v1305, 2
      %v1307 = vadd.f32 %v1305, %v1306
      %v1308 = vrot.slane %v1307, 1
      %v1309 = vadd.f32 %v1307, %v1308
      %v1310 = vsel %vm824, %v1282, 0.0
      %v1311 = vrot.slane %v1310, 4
      %v1312 = vadd.f32 %v1310, %v1311
      %v1313 = vrot.slane %v1312, 2
      %v1314 = vadd.f32 %v1312, %v1313
      %v1315 = vrot.slane %v1314, 1
      %v1316 = vadd.f32 %v1314, %v1315
      %v1317 = vsel %vm824, %v1283, 0.0
      %v1318 = vrot.slane %v1317, 4
      %v1319 = vadd.f32 %v1317, %v1318
      %v1320 = vrot.slane %v1319, 2
      %v1321 = vadd.f32 %v1319, %v1320
      %v1322 = vrot.slane %v1321, 1
      %v1323 = vadd.f32 %v1321, %v1322
      %v1324 = vsel %vm824, %v1284, 0.0
      %v1325 = vrot.slane %v1324, 4
      %v1326 = vadd.f32 %v1324, %v1325
      %v1327 = vrot.slane %v1326, 2
      %v1328 = vadd.f32 %v1326, %v1327
      %v1329 = vrot.slane %v1328, 1
      %v1330 = vadd.f32 %v1328, %v1329
      %v1331 = vsel %vm824, %v1285, 0.0
      %v1332 = vrot.slane %v1331, 4
      %v1333 = vadd.f32 %v1331, %v1332
      %v1334 = vrot.slane %v1333, 2
      %v1335 = vadd.f32 %v1333, %v1334
      %v1336 = vrot.slane %v1335, 1
      %v1337 = vadd.f32 %v1335, %v1336
      %v1338 = vsel %vm824, %v1286, 0.0
      %v1339 = vrot.slane %v1338, 4
      %v1340 = vadd.f32 %v1338, %v1339
      %v1341 = vrot.slane %v1340, 2
      %v1342 = vadd.f32 %v1340, %v1341
      %v1343 = vrot.slane %v1342, 1
      %v1344 = vadd.f32 %v1342, %v1343
      %v1345 = vsel %vm824, %v1287, 0.0
      %v1346 = vrot.slane %v1345, 4
      %v1347 = vadd.f32 %v1345, %v1346
      %v1348 = vrot.slane %v1347, 2
      %v1349 = vadd.f32 %v1347, %v1348
      %v1350 = vrot.slane %v1349, 1
      %v1351 = vadd.f32 %v1349, %v1350
      %v1352 = vsel %vm824, %v1288, 0.0
      %v1353 = vrot.slane %v1352, 4
      %v1354 = vadd.f32 %v1352, %v1353
      %v1355 = vrot.slane %v1354, 2
      %v1356 = vadd.f32 %v1354, %v1355
      %v1357 = vrot.slane %v1356, 1
      %v1358 = vadd.f32 %v1356, %v1357
      %v1359 = vsel %vm824, %v1289, 0.0
      %v1360 = vrot.slane %v1359, 4
      %v1361 = vadd.f32 %v1359, %v1360
      %v1362 = vrot.slane %v1361, 2
      %v1363 = vadd.f32 %v1361, %v1362
      %v1364 = vrot.slane %v1363, 1
      %v1365 = vadd.f32 %v1363, %v1364
      %v1366 = vsel %vm824, %v1290, 0.0
      %v1367 = vrot.slane %v1366, 4
      %v1368 = vadd.f32 %v1366, %v1367
      %v1369 = vrot.slane %v1368, 2
      %v1370 = vadd.f32 %v1368, %v1369
      %v1371 = vrot.slane %v1370, 1
      %v1372 = vadd.f32 %v1370, %v1371
      %v1373 = vsel %vm824, %v1291, 0.0
      %v1374 = vrot.slane %v1373, 4
      %v1375 = vadd.f32 %v1373, %v1374
      %v1376 = vrot.slane %v1375, 2
      %v1377 = vadd.f32 %v1375, %v1376
      %v1378 = vrot.slane %v1377, 1
      %v1379 = vadd.f32 %v1377, %v1378
      %v1380 = vsel %vm824, %v1292, 0.0
      %v1381 = vrot.slane %v1380, 4
      %v1382 = vadd.f32 %v1380, %v1381
      %v1383 = vrot.slane %v1382, 2
      %v1384 = vadd.f32 %v1382, %v1383
      %v1385 = vrot.slane %v1384, 1
      %v1386 = vadd.f32 %v1384, %v1385
      %v1387 = vsel %vm824, %v1293, 0.0
      %v1388 = vrot.slane %v1387, 4
      %v1389 = vadd.f32 %v1387, %v1388
      %v1390 = vrot.slane %v1389, 2
      %v1391 = vadd.f32 %v1389, %v1390
      %v1392 = vrot.slane %v1391, 1
      %v1393 = vadd.f32 %v1391, %v1392
      %v1394 = vsel %vm824, %v1294, 0.0
      %v1395 = vrot.slane %v1394, 4
      %v1396 = vadd.f32 %v1394, %v1395
      %v1397 = vrot.slane %v1396, 2
      %v1398 = vadd.f32 %v1396, %v1397
      %v1399 = vrot.slane %v1398, 1
      %v1400 = vadd.f32 %v1398, %v1399
      %v1401 = vsel %vm824, %v1295, 0.0
      %v1402 = vrot.slane %v1401, 4
      %v1403 = vadd.f32 %v1401, %v1402
      %v1404 = vrot.slane %v1403, 2
      %v1405 = vadd.f32 %v1403, %v1404
      %v1406 = vrot.slane %v1405, 1
      %v1407 = vadd.f32 %v1405, %v1406
      %vm1424 = vcmask 1041409
      %v1425 = vsel %vm1424, %v1309, %v1302
      %vm1426 = vcmask 1042434
      %v1427 = vsel %vm1426, %v1316, %v1425
      %vm1428 = vcmask 1043459
      %v1429 = vsel %vm1428, %v1323, %v1427
      %vm1430 = vcmask 1044484
      %v1431 = vsel %vm1430, %v1330, %v1429
      %vm1432 = vcmask 1045509
      %v1433 = vsel %vm1432, %v1337, %v1431
      %vm1434 = vcmask 1046534
      %v1435 = vsel %vm1434, %v1344, %v1433
      %vm1436 = vcmask 1047559
      %v1437 = vsel %vm1436, %v1351, %v1435
      %v1438 = vsel %vm1424, %v1365, %v1358
      %v1439 = vsel %vm1426, %v1372, %v1438
      %v1440 = vsel %vm1428, %v1379, %v1439
      %v1441 = vsel %vm1430, %v1386, %v1440
      %v1442 = vsel %vm1432, %v1393, %v1441
      %v1443 = vsel %vm1434, %v1400, %v1442
      %v1444 = vsel %vm1436, %v1407, %v1443
      %v1445 = vsel %vm824, %v1437, 0
      %v1447 = vsel %vm824, %v1444, 0
      %1449 = vmatprep.subr.mxu0 0.0
      %1450 = vmatpush1.msra.mxu0 0.0
      %1451 = vmatprep.subr.mxu0 0.0
      %1452 = vmatpush1.msra.mxu0 0.0
      %1453 = vmatprep.subr.mxu0 0.0
      %1454 = vmatpush1.msra.mxu0 0.0
      %1455 = vmatprep.subr.mxu0 0.0
      %1456 = vmatpush1.msra.mxu0 0.0
      %1457 = vmatprep.subr.mxu0 0.0
      %1458 = vmatpush1.msra.mxu0 0.0
      %1459 = vmatprep.subr.mxu0 0.0
      %1460 = vmatpush1.msra.mxu0 0.0
      %1461 = vmatprep.subr.mxu0 0.0
      %1462 = vmatpush1.msra.mxu0 0.0
      %1463 = vmatprep.subr.mxu0 0.0
      %1464 = vmatpush1.msra.mxu0 0.0
      %1465 = vmatprep.subr.mxu0 0.0
      %1466 = vmatpush1.msra.mxu0 0.0
      %1467 = vmatprep.subr.mxu0 0.0
      %1468 = vmatpush1.msra.mxu0 0.0
      %1469 = vmatprep.subr.mxu0 0.0
      %1470 = vmatpush1.msra.mxu0 0.0
      %1471 = vmatprep.subr.mxu0 0.0
      %1472 = vmatpush1.msra.mxu0 0.0
      %1473 = vmatprep.subr.mxu0 0.0
      %1474 = vmatpush1.msra.mxu0 %v1198
      %1475 = vmatprep.subr.mxu0 0.0
      %1476 = vmatpush1.msra.mxu0 %v1197
      %1477 = vmatprep.subr.mxu0 0.0
      %1478 = vmatpush1.msra.mxu0 %v1196
      %1479 = vmatprep.subr.mxu0 0.0
      %1480 = vmatpush1.msra.mxu0 %v1195
      %1481 = vmatprep.subr.mxu0 0.0
      %1482 = vmatpush2.msra.mxu0 0.0
      %1483 = vmatprep.subr.mxu0 0.0
      %1484 = vmatpush2.msra.mxu0 0.0
      %1485 = vmatprep.subr.mxu0 0.0
      %1486 = vmatpush2.msra.mxu0 0.0
      %1487 = vmatprep.subr.mxu0 0.0
      %1488 = vmatpush2.msra.mxu0 0.0
      %1489 = vmatprep.subr.mxu0 0.0
      %1490 = vmatpush2.msra.mxu0 0.0
      %1491 = vmatprep.subr.mxu0 0.0
      %1492 = vmatpush2.msra.mxu0 0.0
      %1493 = vmatprep.subr.mxu0 0.0
      %1494 = vmatpush2.msra.mxu0 0.0
      %1495 = vmatprep.subr.mxu0 0.0
      %1496 = vmatpush2.msra.mxu0 0.0
      %1497 = vmatprep.subr.mxu0 0.0
      %1498 = vmatpush2.msra.mxu0 0.0
      %1499 = vmatprep.subr.mxu0 0.0
      %1500 = vmatpush2.msra.mxu0 0.0
      %1501 = vmatprep.subr.mxu0 0.0
      %1502 = vmatpush2.msra.mxu0 0.0
      %1503 = vmatprep.subr.mxu0 0.0
      %1504 = vmatpush2.msra.mxu0 0.0
      %1505 = vmatprep.subr.mxu0 0.0
      %1506 = vmatpush2.msra.mxu0 0.0
      %1507 = vmatprep.subr.mxu0 0.0
      %1508 = vmatpush2.msra.mxu0 0.0
      %1509 = vmatprep.subr.mxu0 0.0
      %1510 = vmatpush2.msra.mxu0 0.0
      %1511 = vmatprep.subr.mxu0 0.0
      %1512 = vmatpush2.msra.mxu0 0.0
      %1513 = vmatprep.mubr.f32.mxu0 0.0
      %1514 = vmatmul.mubr.f32.gmra.mxu0 %v1445
      %v1515 = vpop.f32.mrf.mxu0
      %v1516 = vadd.f32 0.0, %v1515
      %v1517 = vpop.f32.mrf.mxu0
      %1518 = vmatprep.mubr.f32.mxu0 0.0
      %1519 = vmatmul.mubr.f32.gmra.mxu0 %v1447
      %v1520 = vpop.f32.mrf.mxu0
      %v1521 = vadd.f32 0.0, %v1520
      %v1522 = vpop.f32.mrf.mxu0
      %1523 = vdwg.mxu0
      %v1525 = vlaneseq
      %v1526 = vshrl.u32 %v1525, 7
      %v1527 = vsub.s32 0, %v1526
      %v1528 = vrot.slane %v1199, %v1527
      %v1530 = vmul.f32 %v1516, %v1528
      %v1531 = vmul.f32 %v1521, %v1528
      %vm1532 = vcmask 523264
      %v1533 = vsel %vm1532, %v1530, 0.0
      %1534 = vadd.xlane.f32.xlu0 %v1533
      %v1535 = vpop.xlane.xlu0 %1534
      %v1536 = vsel %vm1532, %v1531, 0.0
      %1537 = vadd.xlane.f32.xlu0 %v1536
      %v1538 = vpop.xlane.xlu0 %1537
      %1539 = vset.pattern.permute.xlu0 1
      %1540 = vperm.xlu0 %1539, %v1179
      %v1541 = vpop.permute.xlu0 %1540
      %1543 = vset.pattern.permute.xlu0 1
      %1544 = vperm.xlu0 %1543, %v1180
      %v1545 = vpop.permute.xlu0 %1544
      %1547 = vset.pattern.permute.xlu0 1
      %1548 = vperm.xlu0 %1547, %v1181
      %v1549 = vpop.permute.xlu0 %1548
      %1551 = vset.pattern.permute.xlu0 1
      %1552 = vperm.xlu0 %1551, %v1182
      %v1553 = vpop.permute.xlu0 %1552
      %1555 = vset.pattern.permute.xlu0 1
      %1556 = vperm.xlu0 %1555, %v1183
      %v1557 = vpop.permute.xlu0 %1556
      %1559 = vset.pattern.permute.xlu0 1
      %1560 = vperm.xlu0 %1559, %v1184
      %v1561 = vpop.permute.xlu0 %1560
      %1563 = vset.pattern.permute.xlu0 1
      %1564 = vperm.xlu0 %1563, %v1185
      %v1565 = vpop.permute.xlu0 %1564
      %1567 = vset.pattern.permute.xlu0 1
      %1568 = vperm.xlu0 %1567, %v1186
      %v1569 = vpop.permute.xlu0 %1568
      %1571 = vset.pattern.permute.xlu0 1
      %1572 = vperm.xlu0 %1571, %v1187
      %v1573 = vpop.permute.xlu0 %1572
      %1575 = vset.pattern.permute.xlu0 1
      %1576 = vperm.xlu0 %1575, %v1188
      %v1577 = vpop.permute.xlu0 %1576
      %1579 = vset.pattern.permute.xlu0 1
      %1580 = vperm.xlu0 %1579, %v1189
      %v1581 = vpop.permute.xlu0 %1580
      %1583 = vset.pattern.permute.xlu0 1
      %1584 = vperm.xlu0 %1583, %v1190
      %v1585 = vpop.permute.xlu0 %1584
      %1587 = vset.pattern.permute.xlu0 1
      %1588 = vperm.xlu0 %1587, %v1191
      %v1589 = vpop.permute.xlu0 %1588
      %1591 = vset.pattern.permute.xlu0 1
      %1592 = vperm.xlu0 %1591, %v1192
      %v1593 = vpop.permute.xlu0 %1592
      %1595 = vset.pattern.permute.xlu0 1
      %1596 = vperm.xlu0 %1595, %v1193
      %v1597 = vpop.permute.xlu0 %1596
      %1599 = vset.pattern.permute.xlu0 1
      %1600 = vperm.xlu0 %1599, %v1194
      %v1601 = vpop.permute.xlu0 %1600
      %v1603 = vmul.f32 %v1541, %v804
      %v1604 = vmul.f32 %v1545, %v805
      %v1605 = vmul.f32 %v1549, %v806
      %v1606 = vmul.f32 %v1553, %v807
      %v1607 = vmul.f32 %v1557, %v808
      %v1608 = vmul.f32 %v1561, %v809
      %v1609 = vmul.f32 %v1565, %v810
      %v1610 = vmul.f32 %v1569, %v811
      %v1611 = vmul.f32 %v1573, %v812
      %v1612 = vmul.f32 %v1577, %v813
      %v1613 = vmul.f32 %v1581, %v814
      %v1614 = vmul.f32 %v1585, %v815
      %v1615 = vmul.f32 %v1589, %v816
      %v1616 = vmul.f32 %v1593, %v817
      %v1617 = vmul.f32 %v1597, %v818
      %v1618 = vmul.f32 %v1601, %v819
      %v1619 = vsel %vm824, %v1603, 0.0
      %v1620 = vrot.slane %v1619, 4
      %v1621 = vadd.f32 %v1619, %v1620
      %v1622 = vrot.slane %v1621, 2
      %v1623 = vadd.f32 %v1621, %v1622
      %v1624 = vrot.slane %v1623, 1
      %v1625 = vadd.f32 %v1623, %v1624
      %v1626 = vsel %vm824, %v1604, 0.0
      %v1627 = vrot.slane %v1626, 4
      %v1628 = vadd.f32 %v1626, %v1627
      %v1629 = vrot.slane %v1628, 2
      %v1630 = vadd.f32 %v1628, %v1629
      %v1631 = vrot.slane %v1630, 1
      %v1632 = vadd.f32 %v1630, %v1631
      %v1633 = vsel %vm824, %v1605, 0.0
      %v1634 = vrot.slane %v1633, 4
      %v1635 = vadd.f32 %v1633, %v1634
      %v1636 = vrot.slane %v1635, 2
      %v1637 = vadd.f32 %v1635, %v1636
      %v1638 = vrot.slane %v1637, 1
      %v1639 = vadd.f32 %v1637, %v1638
      %v1640 = vsel %vm824, %v1606, 0.0
      %v1641 = vrot.slane %v1640, 4
      %v1642 = vadd.f32 %v1640, %v1641
      %v1643 = vrot.slane %v1642, 2
      %v1644 = vadd.f32 %v1642, %v1643
      %v1645 = vrot.slane %v1644, 1
      %v1646 = vadd.f32 %v1644, %v1645
      %v1647 = vsel %vm824, %v1607, 0.0
      %v1648 = vrot.slane %v1647, 4
      %v1649 = vadd.f32 %v1647, %v1648
      %v1650 = vrot.slane %v1649, 2
      %v1651 = vadd.f32 %v1649, %v1650
      %v1652 = vrot.slane %v1651, 1
      %v1653 = vadd.f32 %v1651, %v1652
      %v1654 = vsel %vm824, %v1608, 0.0
      %v1655 = vrot.slane %v1654, 4
      %v1656 = vadd.f32 %v1654, %v1655
      %v1657 = vrot.slane %v1656, 2
      %v1658 = vadd.f32 %v1656, %v1657
      %v1659 = vrot.slane %v1658, 1
      %v1660 = vadd.f32 %v1658, %v1659
      %v1661 = vsel %vm824, %v1609, 0.0
      %v1662 = vrot.slane %v1661, 4
      %v1663 = vadd.f32 %v1661, %v1662
      %v1664 = vrot.slane %v1663, 2
      %v1665 = vadd.f32 %v1663, %v1664
      %v1666 = vrot.slane %v1665, 1
      %v1667 = vadd.f32 %v1665, %v1666
      %v1668 = vsel %vm824, %v1610, 0.0
      %v1669 = vrot.slane %v1668, 4
      %v1670 = vadd.f32 %v1668, %v1669
      %v1671 = vrot.slane %v1670, 2
      %v1672 = vadd.f32 %v1670, %v1671
      %v1673 = vrot.slane %v1672, 1
      %v1674 = vadd.f32 %v1672, %v1673
      %v1675 = vsel %vm824, %v1611, 0.0
      %v1676 = vrot.slane %v1675, 4
      %v1677 = vadd.f32 %v1675, %v1676
      %v1678 = vrot.slane %v1677, 2
      %v1679 = vadd.f32 %v1677, %v1678
      %v1680 = vrot.slane %v1679, 1
      %v1681 = vadd.f32 %v1679, %v1680
      %v1682 = vsel %vm824, %v1612, 0.0
      %v1683 = vrot.slane %v1682, 4
      %v1684 = vadd.f32 %v1682, %v1683
      %v1685 = vrot.slane %v1684, 2
      %v1686 = vadd.f32 %v1684, %v1685
      %v1687 = vrot.slane %v1686, 1
      %v1688 = vadd.f32 %v1686, %v1687
      %v1689 = vsel %vm824, %v1613, 0.0
      %v1690 = vrot.slane %v1689, 4
      %v1691 = vadd.f32 %v1689, %v1690
      %v1692 = vrot.slane %v1691, 2
      %v1693 = vadd.f32 %v1691, %v1692
      %v1694 = vrot.slane %v1693, 1
      %v1695 = vadd.f32 %v1693, %v1694
      %v1696 = vsel %vm824, %v1614, 0.0
      %v1697 = vrot.slane %v1696, 4
      %v1698 = vadd.f32 %v1696, %v1697
      %v1699 = vrot.slane %v1698, 2
      %v1700 = vadd.f32 %v1698, %v1699
      %v1701 = vrot.slane %v1700, 1
      %v1702 = vadd.f32 %v1700, %v1701
      %v1703 = vsel %vm824, %v1615, 0.0
      %v1704 = vrot.slane %v1703, 4
      %v1705 = vadd.f32 %v1703, %v1704
      %v1706 = vrot.slane %v1705, 2
      %v1707 = vadd.f32 %v1705, %v1706
      %v1708 = vrot.slane %v1707, 1
      %v1709 = vadd.f32 %v1707, %v1708
      %v1710 = vsel %vm824, %v1616, 0.0
      %v1711 = vrot.slane %v1710, 4
      %v1712 = vadd.f32 %v1710, %v1711
      %v1713 = vrot.slane %v1712, 2
      %v1714 = vadd.f32 %v1712, %v1713
      %v1715 = vrot.slane %v1714, 1
      %v1716 = vadd.f32 %v1714, %v1715
      %v1717 = vsel %vm824, %v1617, 0.0
      %v1718 = vrot.slane %v1717, 4
      %v1719 = vadd.f32 %v1717, %v1718
      %v1720 = vrot.slane %v1719, 2
      %v1721 = vadd.f32 %v1719, %v1720
      %v1722 = vrot.slane %v1721, 1
      %v1723 = vadd.f32 %v1721, %v1722
      %v1724 = vsel %vm824, %v1618, 0.0
      %v1725 = vrot.slane %v1724, 4
      %v1726 = vadd.f32 %v1724, %v1725
      %v1727 = vrot.slane %v1726, 2
      %v1728 = vadd.f32 %v1726, %v1727
      %v1729 = vrot.slane %v1728, 1
      %v1730 = vadd.f32 %v1728, %v1729
      %v1747 = vsel %vm1424, %v1632, %v1625
      %v1748 = vsel %vm1426, %v1639, %v1747
      %v1749 = vsel %vm1428, %v1646, %v1748
      %v1750 = vsel %vm1430, %v1653, %v1749
      %v1751 = vsel %vm1432, %v1660, %v1750
      %v1752 = vsel %vm1434, %v1667, %v1751
      %v1753 = vsel %vm1436, %v1674, %v1752
      %v1754 = vsel %vm1424, %v1688, %v1681
      %v1755 = vsel %vm1426, %v1695, %v1754
      %v1756 = vsel %vm1428, %v1702, %v1755
      %v1757 = vsel %vm1430, %v1709, %v1756
      %v1758 = vsel %vm1432, %v1716, %v1757
      %v1759 = vsel %vm1434, %v1723, %v1758
      %v1760 = vsel %vm1436, %v1730, %v1759
      %v1761 = vsel %vm824, %v1753, 0
      %v1763 = vsel %vm824, %v1760, 0
      %1765 = vmatprep.subr.mxu0 0.0
      %1766 = vmatpush1.msra.mxu0 0.0
      %1767 = vmatprep.subr.mxu0 0.0
      %1768 = vmatpush1.msra.mxu0 0.0
      %1769 = vmatprep.subr.mxu0 0.0
      %1770 = vmatpush1.msra.mxu0 0.0
      %1771 = vmatprep.subr.mxu0 0.0
      %1772 = vmatpush1.msra.mxu0 0.0
      %1773 = vmatprep.subr.mxu0 0.0
      %1774 = vmatpush1.msra.mxu0 0.0
      %1775 = vmatprep.subr.mxu0 0.0
      %1776 = vmatpush1.msra.mxu0 0.0
      %1777 = vmatprep.subr.mxu0 0.0
      %1778 = vmatpush1.msra.mxu0 0.0
      %1779 = vmatprep.subr.mxu0 0.0
      %1780 = vmatpush1.msra.mxu0 0.0
      %1781 = vmatprep.subr.mxu0 0.0
      %1782 = vmatpush1.msra.mxu0 0.0
      %1783 = vmatprep.subr.mxu0 0.0
      %1784 = vmatpush1.msra.mxu0 0.0
      %1785 = vmatprep.subr.mxu0 0.0
      %1786 = vmatpush1.msra.mxu0 0.0
      %1787 = vmatprep.subr.mxu0 0.0
      %1788 = vmatpush1.msra.mxu0 0.0
      %1789 = vmatprep.subr.mxu0 0.0
      %1790 = vmatpush1.msra.mxu0 %v1198
      %1791 = vmatprep.subr.mxu0 0.0
      %1792 = vmatpush1.msra.mxu0 %v1197
      %1793 = vmatprep.subr.mxu0 0.0
      %1794 = vmatpush1.msra.mxu0 %v1196
      %1795 = vmatprep.subr.mxu0 0.0
      %1796 = vmatpush1.msra.mxu0 %v1195
      %1797 = vmatprep.subr.mxu0 0.0
      %1798 = vmatpush2.msra.mxu0 0.0
      %1799 = vmatprep.subr.mxu0 0.0
      %1800 = vmatpush2.msra.mxu0 0.0
      %1801 = vmatprep.subr.mxu0 0.0
      %1802 = vmatpush2.msra.mxu0 0.0
      %1803 = vmatprep.subr.mxu0 0.0
      %1804 = vmatpush2.msra.mxu0 0.0
      %1805 = vmatprep.subr.mxu0 0.0
      %1806 = vmatpush2.msra.mxu0 0.0
      %1807 = vmatprep.subr.mxu0 0.0
      %1808 = vmatpush2.msra.mxu0 0.0
      %1809 = vmatprep.subr.mxu0 0.0
      %1810 = vmatpush2.msra.mxu0 0.0
      %1811 = vmatprep.subr.mxu0 0.0
      %1812 = vmatpush2.msra.mxu0 0.0
      %1813 = vmatprep.subr.mxu0 0.0
      %1814 = vmatpush2.msra.mxu0 0.0
      %1815 = vmatprep.subr.mxu0 0.0
      %1816 = vmatpush2.msra.mxu0 0.0
      %1817 = vmatprep.subr.mxu0 0.0
      %1818 = vmatpush2.msra.mxu0 0.0
      %1819 = vmatprep.subr.mxu0 0.0
      %1820 = vmatpush2.msra.mxu0 0.0
      %1821 = vmatprep.subr.mxu0 0.0
      %1822 = vmatpush2.msra.mxu0 0.0
      %1823 = vmatprep.subr.mxu0 0.0
      %1824 = vmatpush2.msra.mxu0 0.0
      %1825 = vmatprep.subr.mxu0 0.0
      %1826 = vmatpush2.msra.mxu0 0.0
      %1827 = vmatprep.subr.mxu0 0.0
      %1828 = vmatpush2.msra.mxu0 0.0
      %1829 = vmatprep.mubr.f32.mxu0 0.0
      %1830 = vmatmul.mubr.f32.gmra.mxu0 %v1761
      %v1831 = vpop.f32.mrf.mxu0
      %v1832 = vadd.f32 0.0, %v1831
      %v1833 = vpop.f32.mrf.mxu0
      %1834 = vmatprep.mubr.f32.mxu0 0.0
      %1835 = vmatmul.mubr.f32.gmra.mxu0 %v1763
      %v1836 = vpop.f32.mrf.mxu0
      %v1837 = vadd.f32 0.0, %v1836
      %v1838 = vpop.f32.mrf.mxu0
      %1839 = vdwg.mxu0
      %v1840 = vmul.f32 %v1832, %v1528
      %v1841 = vmul.f32 %v1837, %v1528
      %v1842 = vsel %vm1532, %v1840, 0.0
      %1843 = vadd.xlane.f32.xlu0 %v1842
      %v1844 = vpop.xlane.xlu0 %1843
      %v1845 = vsel %vm1532, %v1841, 0.0
      %1846 = vadd.xlane.f32.xlu0 %v1845
      %v1847 = vpop.xlane.xlu0 %1846
      %1848 = vset.pattern.permute.xlu0 2
      %1849 = vperm.xlu0 %1848, %v1179
      %v1850 = vpop.permute.xlu0 %1849
      %1852 = vset.pattern.permute.xlu0 2
      %1853 = vperm.xlu0 %1852, %v1180
      %v1854 = vpop.permute.xlu0 %1853
      %1856 = vset.pattern.permute.xlu0 2
      %1857 = vperm.xlu0 %1856, %v1181
      %v1858 = vpop.permute.xlu0 %1857
      %1860 = vset.pattern.permute.xlu0 2
      %1861 = vperm.xlu0 %1860, %v1182
      %v1862 = vpop.permute.xlu0 %1861
      %1864 = vset.pattern.permute.xlu0 2
      %1865 = vperm.xlu0 %1864, %v1183
      %v1866 = vpop.permute.xlu0 %1865
      %1868 = vset.pattern.permute.xlu0 2
      %1869 = vperm.xlu0 %1868, %v1184
      %v1870 = vpop.permute.xlu0 %1869
      %1872 = vset.pattern.permute.xlu0 2
      %1873 = vperm.xlu0 %1872, %v1185
      %v1874 = vpop.permute.xlu0 %1873
      %1876 = vset.pattern.permute.xlu0 2
      %1877 = vperm.xlu0 %1876, %v1186
      %v1878 = vpop.permute.xlu0 %1877
      %1880 = vset.pattern.permute.xlu0 2
      %1881 = vperm.xlu0 %1880, %v1187
      %v1882 = vpop.permute.xlu0 %1881
      %1884 = vset.pattern.permute.xlu0 2
      %1885 = vperm.xlu0 %1884, %v1188
      %v1886 = vpop.permute.xlu0 %1885
      %1888 = vset.pattern.permute.xlu0 2
      %1889 = vperm.xlu0 %1888, %v1189
      %v1890 = vpop.permute.xlu0 %1889
      %1892 = vset.pattern.permute.xlu0 2
      %1893 = vperm.xlu0 %1892, %v1190
      %v1894 = vpop.permute.xlu0 %1893
      %1896 = vset.pattern.permute.xlu0 2
      %1897 = vperm.xlu0 %1896, %v1191
      %v1898 = vpop.permute.xlu0 %1897
      %1900 = vset.pattern.permute.xlu0 2
      %1901 = vperm.xlu0 %1900, %v1192
      %v1902 = vpop.permute.xlu0 %1901
      %1904 = vset.pattern.permute.xlu0 2
      %1905 = vperm.xlu0 %1904, %v1193
      %v1906 = vpop.permute.xlu0 %1905
      %1908 = vset.pattern.permute.xlu0 2
      %1909 = vperm.xlu0 %1908, %v1194
      %v1910 = vpop.permute.xlu0 %1909
      %v1912 = vmul.f32 %v1850, %v804
      %v1913 = vmul.f32 %v1854, %v805
      %v1914 = vmul.f32 %v1858, %v806
      %v1915 = vmul.f32 %v1862, %v807
      %v1916 = vmul.f32 %v1866, %v808
      %v1917 = vmul.f32 %v1870, %v809
      %v1918 = vmul.f32 %v1874, %v810
      %v1919 = vmul.f32 %v1878, %v811
      %v1920 = vmul.f32 %v1882, %v812
      %v1921 = vmul.f32 %v1886, %v813
      %v1922 = vmul.f32 %v1890, %v814
      %v1923 = vmul.f32 %v1894, %v815
      %v1924 = vmul.f32 %v1898, %v816
      %v1925 = vmul.f32 %v1902, %v817
      %v1926 = vmul.f32 %v1906, %v818
      %v1927 = vmul.f32 %v1910, %v819
      %v1928 = vsel %vm824, %v1912, 0.0
      %v1929 = vrot.slane %v1928, 4
      %v1930 = vadd.f32 %v1928, %v1929
      %v1931 = vrot.slane %v1930, 2
      %v1932 = vadd.f32 %v1930, %v1931
      %v1933 = vrot.slane %v1932, 1
      %v1934 = vadd.f32 %v1932, %v1933
      %v1935 = vsel %vm824, %v1913, 0.0
      %v1936 = vrot.slane %v1935, 4
      %v1937 = vadd.f32 %v1935, %v1936
      %v1938 = vrot.slane %v1937, 2
      %v1939 = vadd.f32 %v1937, %v1938
      %v1940 = vrot.slane %v1939, 1
      %v1941 = vadd.f32 %v1939, %v1940
      %v1942 = vsel %vm824, %v1914, 0.0
      %v1943 = vrot.slane %v1942, 4
      %v1944 = vadd.f32 %v1942, %v1943
      %v1945 = vrot.slane %v1944, 2
      %v1946 = vadd.f32 %v1944, %v1945
      %v1947 = vrot.slane %v1946, 1
      %v1948 = vadd.f32 %v1946, %v1947
      %v1949 = vsel %vm824, %v1915, 0.0
      %v1950 = vrot.slane %v1949, 4
      %v1951 = vadd.f32 %v1949, %v1950
      %v1952 = vrot.slane %v1951, 2
      %v1953 = vadd.f32 %v1951, %v1952
      %v1954 = vrot.slane %v1953, 1
      %v1955 = vadd.f32 %v1953, %v1954
      %v1956 = vsel %vm824, %v1916, 0.0
      %v1957 = vrot.slane %v1956, 4
      %v1958 = vadd.f32 %v1956, %v1957
      %v1959 = vrot.slane %v1958, 2
      %v1960 = vadd.f32 %v1958, %v1959
      %v1961 = vrot.slane %v1960, 1
      %v1962 = vadd.f32 %v1960, %v1961
      %v1963 = vsel %vm824, %v1917, 0.0
      %v1964 = vrot.slane %v1963, 4
      %v1965 = vadd.f32 %v1963, %v1964
      %v1966 = vrot.slane %v1965, 2
      %v1967 = vadd.f32 %v1965, %v1966
      %v1968 = vrot.slane %v1967, 1
      %v1969 = vadd.f32 %v1967, %v1968
      %v1970 = vsel %vm824, %v1918, 0.0
      %v1971 = vrot.slane %v1970, 4
      %v1972 = vadd.f32 %v1970, %v1971
      %v1973 = vrot.slane %v1972, 2
      %v1974 = vadd.f32 %v1972, %v1973
      %v1975 = vrot.slane %v1974, 1
      %v1976 = vadd.f32 %v1974, %v1975
      %v1977 = vsel %vm824, %v1919, 0.0
      %v1978 = vrot.slane %v1977, 4
      %v1979 = vadd.f32 %v1977, %v1978
      %v1980 = vrot.slane %v1979, 2
      %v1981 = vadd.f32 %v1979, %v1980
      %v1982 = vrot.slane %v1981, 1
      %v1983 = vadd.f32 %v1981, %v1982
      %v1984 = vsel %vm824, %v1920, 0.0
      %v1985 = vrot.slane %v1984, 4
      %v1986 = vadd.f32 %v1984, %v1985
      %v1987 = vrot.slane %v1986, 2
      %v1988 = vadd.f32 %v1986, %v1987
      %v1989 = vrot.slane %v1988, 1
      %v1990 = vadd.f32 %v1988, %v1989
      %v1991 = vsel %vm824, %v1921, 0.0
      %v1992 = vrot.slane %v1991, 4
      %v1993 = vadd.f32 %v1991, %v1992
      %v1994 = vrot.slane %v1993, 2
      %v1995 = vadd.f32 %v1993, %v1994
      %v1996 = vrot.slane %v1995, 1
      %v1997 = vadd.f32 %v1995, %v1996
      %v1998 = vsel %vm824, %v1922, 0.0
      %v1999 = vrot.slane %v1998, 4
      %v2000 = vadd.f32 %v1998, %v1999
      %v2001 = vrot.slane %v2000, 2
      %v2002 = vadd.f32 %v2000, %v2001
      %v2003 = vrot.slane %v2002, 1
      %v2004 = vadd.f32 %v2002, %v2003
      %v2005 = vsel %vm824, %v1923, 0.0
      %v2006 = vrot.slane %v2005, 4
      %v2007 = vadd.f32 %v2005, %v2006
      %v2008 = vrot.slane %v2007, 2
      %v2009 = vadd.f32 %v2007, %v2008
      %v2010 = vrot.slane %v2009, 1
      %v2011 = vadd.f32 %v2009, %v2010
      %v2012 = vsel %vm824, %v1924, 0.0
      %v2013 = vrot.slane %v2012, 4
      %v2014 = vadd.f32 %v2012, %v2013
      %v2015 = vrot.slane %v2014, 2
      %v2016 = vadd.f32 %v2014, %v2015
      %v2017 = vrot.slane %v2016, 1
      %v2018 = vadd.f32 %v2016, %v2017
      %v2019 = vsel %vm824, %v1925, 0.0
      %v2020 = vrot.slane %v2019, 4
      %v2021 = vadd.f32 %v2019, %v2020
      %v2022 = vrot.slane %v2021, 2
      %v2023 = vadd.f32 %v2021, %v2022
      %v2024 = vrot.slane %v2023, 1
      %v2025 = vadd.f32 %v2023, %v2024
      %v2026 = vsel %vm824, %v1926, 0.0
      %v2027 = vrot.slane %v2026, 4
      %v2028 = vadd.f32 %v2026, %v2027
      %v2029 = vrot.slane %v2028, 2
      %v2030 = vadd.f32 %v2028, %v2029
      %v2031 = vrot.slane %v2030, 1
      %v2032 = vadd.f32 %v2030, %v2031
      %v2033 = vsel %vm824, %v1927, 0.0
      %v2034 = vrot.slane %v2033, 4
      %v2035 = vadd.f32 %v2033, %v2034
      %v2036 = vrot.slane %v2035, 2
      %v2037 = vadd.f32 %v2035, %v2036
      %v2038 = vrot.slane %v2037, 1
      %v2039 = vadd.f32 %v2037, %v2038
      %v2056 = vsel %vm1424, %v1941, %v1934
      %v2057 = vsel %vm1426, %v1948, %v2056
      %v2058 = vsel %vm1428, %v1955, %v2057
      %v2059 = vsel %vm1430, %v1962, %v2058
      %v2060 = vsel %vm1432, %v1969, %v2059
      %v2061 = vsel %vm1434, %v1976, %v2060
      %v2062 = vsel %vm1436, %v1983, %v2061
      %v2063 = vsel %vm1424, %v1997, %v1990
      %v2064 = vsel %vm1426, %v2004, %v2063
      %v2065 = vsel %vm1428, %v2011, %v2064
      %v2066 = vsel %vm1430, %v2018, %v2065
      %v2067 = vsel %vm1432, %v2025, %v2066
      %v2068 = vsel %vm1434, %v2032, %v2067
      %v2069 = vsel %vm1436, %v2039, %v2068
      %v2070 = vsel %vm824, %v2062, 0
      %v2072 = vsel %vm824, %v2069, 0
      %2074 = vmatprep.subr.mxu0 0.0
      %2075 = vmatpush1.msra.mxu0 0.0
      %2076 = vmatprep.subr.mxu0 0.0
      %2077 = vmatpush1.msra.mxu0 0.0
      %2078 = vmatprep.subr.mxu0 0.0
      %2079 = vmatpush1.msra.mxu0 0.0
      %2080 = vmatprep.subr.mxu0 0.0
      %2081 = vmatpush1.msra.mxu0 0.0
      %2082 = vmatprep.subr.mxu0 0.0
      %2083 = vmatpush1.msra.mxu0 0.0
      %2084 = vmatprep.subr.mxu0 0.0
      %2085 = vmatpush1.msra.mxu0 0.0
      %2086 = vmatprep.subr.mxu0 0.0
      %2087 = vmatpush1.msra.mxu0 0.0
      %2088 = vmatprep.subr.mxu0 0.0
      %2089 = vmatpush1.msra.mxu0 0.0
      %2090 = vmatprep.subr.mxu0 0.0
      %2091 = vmatpush1.msra.mxu0 0.0
      %2092 = vmatprep.subr.mxu0 0.0
      %2093 = vmatpush1.msra.mxu0 0.0
      %2094 = vmatprep.subr.mxu0 0.0
      %2095 = vmatpush1.msra.mxu0 0.0
      %2096 = vmatprep.subr.mxu0 0.0
      %2097 = vmatpush1.msra.mxu0 0.0
      %2098 = vmatprep.subr.mxu0 0.0
      %2099 = vmatpush1.msra.mxu0 %v1198
      %2100 = vmatprep.subr.mxu0 0.0
      %2101 = vmatpush1.msra.mxu0 %v1197
      %2102 = vmatprep.subr.mxu0 0.0
      %2103 = vmatpush1.msra.mxu0 %v1196
      %2104 = vmatprep.subr.mxu0 0.0
      %2105 = vmatpush1.msra.mxu0 %v1195
      %2106 = vmatprep.subr.mxu0 0.0
      %2107 = vmatpush2.msra.mxu0 0.0
      %2108 = vmatprep.subr.mxu0 0.0
      %2109 = vmatpush2.msra.mxu0 0.0
      %2110 = vmatprep.subr.mxu0 0.0
      %2111 = vmatpush2.msra.mxu0 0.0
      %2112 = vmatprep.subr.mxu0 0.0
      %2113 = vmatpush2.msra.mxu0 0.0
      %2114 = vmatprep.subr.mxu0 0.0
      %2115 = vmatpush2.msra.mxu0 0.0
      %2116 = vmatprep.subr.mxu0 0.0
      %2117 = vmatpush2.msra.mxu0 0.0
      %2118 = vmatprep.subr.mxu0 0.0
      %2119 = vmatpush2.msra.mxu0 0.0
      %2120 = vmatprep.subr.mxu0 0.0
      %2121 = vmatpush2.msra.mxu0 0.0
      %2122 = vmatprep.subr.mxu0 0.0
      %2123 = vmatpush2.msra.mxu0 0.0
      %2124 = vmatprep.subr.mxu0 0.0
      %2125 = vmatpush2.msra.mxu0 0.0
      %2126 = vmatprep.subr.mxu0 0.0
      %2127 = vmatpush2.msra.mxu0 0.0
      %2128 = vmatprep.subr.mxu0 0.0
      %2129 = vmatpush2.msra.mxu0 0.0
      %2130 = vmatprep.subr.mxu0 0.0
      %2131 = vmatpush2.msra.mxu0 0.0
      %2132 = vmatprep.subr.mxu0 0.0
      %2133 = vmatpush2.msra.mxu0 0.0
      %2134 = vmatprep.subr.mxu0 0.0
      %2135 = vmatpush2.msra.mxu0 0.0
      %2136 = vmatprep.subr.mxu0 0.0
      %2137 = vmatpush2.msra.mxu0 0.0
      %2138 = vmatprep.mubr.f32.mxu0 0.0
      %2139 = vmatmul.mubr.f32.gmra.mxu0 %v2070
      %v2140 = vpop.f32.mrf.mxu0
      %v2141 = vadd.f32 0.0, %v2140
      %v2142 = vpop.f32.mrf.mxu0
      %2143 = vmatprep.mubr.f32.mxu0 0.0
      %2144 = vmatmul.mubr.f32.gmra.mxu0 %v2072
      %v2145 = vpop.f32.mrf.mxu0
      %v2146 = vadd.f32 0.0, %v2145
      %v2147 = vpop.f32.mrf.mxu0
      %2148 = vdwg.mxu0
      %v2149 = vmul.f32 %v2141, %v1528
      %v2150 = vmul.f32 %v2146, %v1528
      %v2151 = vsel %vm1532, %v2149, 0.0
      %2152 = vadd.xlane.f32.xlu0 %v2151
      %v2153 = vpop.xlane.xlu0 %2152
      %v2154 = vsel %vm1532, %v2150, 0.0
      %2155 = vadd.xlane.f32.xlu0 %v2154
      %v2156 = vpop.xlane.xlu0 %2155
      %2157 = vset.pattern.permute.xlu0 3
      %2158 = vperm.xlu0 %2157, %v1179
      %v2159 = vpop.permute.xlu0 %2158
      %2161 = vset.pattern.permute.xlu0 3
      %2162 = vperm.xlu0 %2161, %v1180
      %v2163 = vpop.permute.xlu0 %2162
      %2165 = vset.pattern.permute.xlu0 3
      %2166 = vperm.xlu0 %2165, %v1181
      %v2167 = vpop.permute.xlu0 %2166
      %2169 = vset.pattern.permute.xlu0 3
      %2170 = vperm.xlu0 %2169, %v1182
      %v2171 = vpop.permute.xlu0 %2170
      %2173 = vset.pattern.permute.xlu0 3
      %2174 = vperm.xlu0 %2173, %v1183
      %v2175 = vpop.permute.xlu0 %2174
      %2177 = vset.pattern.permute.xlu0 3
      %2178 = vperm.xlu0 %2177, %v1184
      %v2179 = vpop.permute.xlu0 %2178
      %2181 = vset.pattern.permute.xlu0 3
      %2182 = vperm.xlu0 %2181, %v1185
      %v2183 = vpop.permute.xlu0 %2182
      %2185 = vset.pattern.permute.xlu0 3
      %2186 = vperm.xlu0 %2185, %v1186
      %v2187 = vpop.permute.xlu0 %2186
      %2189 = vset.pattern.permute.xlu0 3
      %2190 = vperm.xlu0 %2189, %v1187
      %v2191 = vpop.permute.xlu0 %2190
      %2193 = vset.pattern.permute.xlu0 3
      %2194 = vperm.xlu0 %2193, %v1188
      %v2195 = vpop.permute.xlu0 %2194
      %2197 = vset.pattern.permute.xlu0 3
      %2198 = vperm.xlu0 %2197, %v1189
      %v2199 = vpop.permute.xlu0 %2198
      %2201 = vset.pattern.permute.xlu0 3
      %2202 = vperm.xlu0 %2201, %v1190
      %v2203 = vpop.permute.xlu0 %2202
      %2205 = vset.pattern.permute.xlu0 3
      %2206 = vperm.xlu0 %2205, %v1191
      %v2207 = vpop.permute.xlu0 %2206
      %2209 = vset.pattern.permute.xlu0 3
      %2210 = vperm.xlu0 %2209, %v1192
      %v2211 = vpop.permute.xlu0 %2210
      %2213 = vset.pattern.permute.xlu0 3
      %2214 = vperm.xlu0 %2213, %v1193
      %v2215 = vpop.permute.xlu0 %2214
      %2217 = vset.pattern.permute.xlu0 3
      %2218 = vperm.xlu0 %2217, %v1194
      %v2219 = vpop.permute.xlu0 %2218
      %v2221 = vmul.f32 %v2159, %v804
      %v2222 = vmul.f32 %v2163, %v805
      %v2223 = vmul.f32 %v2167, %v806
      %v2224 = vmul.f32 %v2171, %v807
      %v2225 = vmul.f32 %v2175, %v808
      %v2226 = vmul.f32 %v2179, %v809
      %v2227 = vmul.f32 %v2183, %v810
      %v2228 = vmul.f32 %v2187, %v811
      %v2229 = vmul.f32 %v2191, %v812
      %v2230 = vmul.f32 %v2195, %v813
      %v2231 = vmul.f32 %v2199, %v814
      %v2232 = vmul.f32 %v2203, %v815
      %v2233 = vmul.f32 %v2207, %v816
      %v2234 = vmul.f32 %v2211, %v817
      %v2235 = vmul.f32 %v2215, %v818
      %v2236 = vmul.f32 %v2219, %v819
      %v2237 = vsel %vm824, %v2221, 0.0
      %v2238 = vrot.slane %v2237, 4
      %v2239 = vadd.f32 %v2237, %v2238
      %v2240 = vrot.slane %v2239, 2
      %v2241 = vadd.f32 %v2239, %v2240
      %v2242 = vrot.slane %v2241, 1
      %v2243 = vadd.f32 %v2241, %v2242
      %v2244 = vsel %vm824, %v2222, 0.0
      %v2245 = vrot.slane %v2244, 4
      %v2246 = vadd.f32 %v2244, %v2245
      %v2247 = vrot.slane %v2246, 2
      %v2248 = vadd.f32 %v2246, %v2247
      %v2249 = vrot.slane %v2248, 1
      %v2250 = vadd.f32 %v2248, %v2249
      %v2251 = vsel %vm824, %v2223, 0.0
      %v2252 = vrot.slane %v2251, 4
      %v2253 = vadd.f32 %v2251, %v2252
      %v2254 = vrot.slane %v2253, 2
      %v2255 = vadd.f32 %v2253, %v2254
      %v2256 = vrot.slane %v2255, 1
      %v2257 = vadd.f32 %v2255, %v2256
      %v2258 = vsel %vm824, %v2224, 0.0
      %v2259 = vrot.slane %v2258, 4
      %v2260 = vadd.f32 %v2258, %v2259
      %v2261 = vrot.slane %v2260, 2
      %v2262 = vadd.f32 %v2260, %v2261
      %v2263 = vrot.slane %v2262, 1
      %v2264 = vadd.f32 %v2262, %v2263
      %v2265 = vsel %vm824, %v2225, 0.0
      %v2266 = vrot.slane %v2265, 4
      %v2267 = vadd.f32 %v2265, %v2266
      %v2268 = vrot.slane %v2267, 2
      %v2269 = vadd.f32 %v2267, %v2268
      %v2270 = vrot.slane %v2269, 1
      %v2271 = vadd.f32 %v2269, %v2270
      %v2272 = vsel %vm824, %v2226, 0.0
      %v2273 = vrot.slane %v2272, 4
      %v2274 = vadd.f32 %v2272, %v2273
      %v2275 = vrot.slane %v2274, 2
      %v2276 = vadd.f32 %v2274, %v2275
      %v2277 = vrot.slane %v2276, 1
      %v2278 = vadd.f32 %v2276, %v2277
      %v2279 = vsel %vm824, %v2227, 0.0
      %v2280 = vrot.slane %v2279, 4
      %v2281 = vadd.f32 %v2279, %v2280
      %v2282 = vrot.slane %v2281, 2
      %v2283 = vadd.f32 %v2281, %v2282
      %v2284 = vrot.slane %v2283, 1
      %v2285 = vadd.f32 %v2283, %v2284
      %v2286 = vsel %vm824, %v2228, 0.0
      %v2287 = vrot.slane %v2286, 4
      %v2288 = vadd.f32 %v2286, %v2287
      %v2289 = vrot.slane %v2288, 2
      %v2290 = vadd.f32 %v2288, %v2289
      %v2291 = vrot.slane %v2290, 1
      %v2292 = vadd.f32 %v2290, %v2291
      %v2293 = vsel %vm824, %v2229, 0.0
      %v2294 = vrot.slane %v2293, 4
      %v2295 = vadd.f32 %v2293, %v2294
      %v2296 = vrot.slane %v2295, 2
      %v2297 = vadd.f32 %v2295, %v2296
      %v2298 = vrot.slane %v2297, 1
      %v2299 = vadd.f32 %v2297, %v2298
      %v2300 = vsel %vm824, %v2230, 0.0
      %v2301 = vrot.slane %v2300, 4
      %v2302 = vadd.f32 %v2300, %v2301
      %v2303 = vrot.slane %v2302, 2
      %v2304 = vadd.f32 %v2302, %v2303
      %v2305 = vrot.slane %v2304, 1
      %v2306 = vadd.f32 %v2304, %v2305
      %v2307 = vsel %vm824, %v2231, 0.0
      %v2308 = vrot.slane %v2307, 4
      %v2309 = vadd.f32 %v2307, %v2308
      %v2310 = vrot.slane %v2309, 2
      %v2311 = vadd.f32 %v2309, %v2310
      %v2312 = vrot.slane %v2311, 1
      %v2313 = vadd.f32 %v2311, %v2312
      %v2314 = vsel %vm824, %v2232, 0.0
      %v2315 = vrot.slane %v2314, 4
      %v2316 = vadd.f32 %v2314, %v2315
      %v2317 = vrot.slane %v2316, 2
      %v2318 = vadd.f32 %v2316, %v2317
      %v2319 = vrot.slane %v2318, 1
      %v2320 = vadd.f32 %v2318, %v2319
      %v2321 = vsel %vm824, %v2233, 0.0
      %v2322 = vrot.slane %v2321, 4
      %v2323 = vadd.f32 %v2321, %v2322
      %v2324 = vrot.slane %v2323, 2
      %v2325 = vadd.f32 %v2323, %v2324
      %v2326 = vrot.slane %v2325, 1
      %v2327 = vadd.f32 %v2325, %v2326
      %v2328 = vsel %vm824, %v2234, 0.0
      %v2329 = vrot.slane %v2328, 4
      %v2330 = vadd.f32 %v2328, %v2329
      %v2331 = vrot.slane %v2330, 2
      %v2332 = vadd.f32 %v2330, %v2331
      %v2333 = vrot.slane %v2332, 1
      %v2334 = vadd.f32 %v2332, %v2333
      %v2335 = vsel %vm824, %v2235, 0.0
      %v2336 = vrot.slane %v2335, 4
      %v2337 = vadd.f32 %v2335, %v2336
      %v2338 = vrot.slane %v2337, 2
      %v2339 = vadd.f32 %v2337, %v2338
      %v2340 = vrot.slane %v2339, 1
      %v2341 = vadd.f32 %v2339, %v2340
      %v2342 = vsel %vm824, %v2236, 0.0
      %v2343 = vrot.slane %v2342, 4
      %v2344 = vadd.f32 %v2342, %v2343
      %v2345 = vrot.slane %v2344, 2
      %v2346 = vadd.f32 %v2344, %v2345
      %v2347 = vrot.slane %v2346, 1
      %v2348 = vadd.f32 %v2346, %v2347
      %v2365 = vsel %vm1424, %v2250, %v2243
      %v2366 = vsel %vm1426, %v2257, %v2365
      %v2367 = vsel %vm1428, %v2264, %v2366
      %v2368 = vsel %vm1430, %v2271, %v2367
      %v2369 = vsel %vm1432, %v2278, %v2368
      %v2370 = vsel %vm1434, %v2285, %v2369
      %v2371 = vsel %vm1436, %v2292, %v2370
      %v2372 = vsel %vm1424, %v2306, %v2299
      %v2373 = vsel %vm1426, %v2313, %v2372
      %v2374 = vsel %vm1428, %v2320, %v2373
      %v2375 = vsel %vm1430, %v2327, %v2374
      %v2376 = vsel %vm1432, %v2334, %v2375
      %v2377 = vsel %vm1434, %v2341, %v2376
      %v2378 = vsel %vm1436, %v2348, %v2377
      %v2379 = vsel %vm824, %v2371, 0
      %v2381 = vsel %vm824, %v2378, 0
      %2383 = vmatprep.subr.mxu0 0.0
      %2384 = vmatpush1.msra.mxu0 0.0
      %2385 = vmatprep.subr.mxu0 0.0
      %2386 = vmatpush1.msra.mxu0 0.0
      %2387 = vmatprep.subr.mxu0 0.0
      %2388 = vmatpush1.msra.mxu0 0.0
      %2389 = vmatprep.subr.mxu0 0.0
      %2390 = vmatpush1.msra.mxu0 0.0
      %2391 = vmatprep.subr.mxu0 0.0
      %2392 = vmatpush1.msra.mxu0 0.0
      %2393 = vmatprep.subr.mxu0 0.0
      %2394 = vmatpush1.msra.mxu0 0.0
      %2395 = vmatprep.subr.mxu0 0.0
      %2396 = vmatpush1.msra.mxu0 0.0
      %2397 = vmatprep.subr.mxu0 0.0
      %2398 = vmatpush1.msra.mxu0 0.0
      %2399 = vmatprep.subr.mxu0 0.0
      %2400 = vmatpush1.msra.mxu0 0.0
      %2401 = vmatprep.subr.mxu0 0.0
      %2402 = vmatpush1.msra.mxu0 0.0
      %2403 = vmatprep.subr.mxu0 0.0
      %2404 = vmatpush1.msra.mxu0 0.0
      %2405 = vmatprep.subr.mxu0 0.0
      %2406 = vmatpush1.msra.mxu0 0.0
      %2407 = vmatprep.subr.mxu0 0.0
      %2408 = vmatpush1.msra.mxu0 %v1198
      %2409 = vmatprep.subr.mxu0 0.0
      %2410 = vmatpush1.msra.mxu0 %v1197
      %2411 = vmatprep.subr.mxu0 0.0
      %2412 = vmatpush1.msra.mxu0 %v1196
      %2413 = vmatprep.subr.mxu0 0.0
      %2414 = vmatpush1.msra.mxu0 %v1195
      %2415 = vmatprep.subr.mxu0 0.0
      %2416 = vmatpush2.msra.mxu0 0.0
      %2417 = vmatprep.subr.mxu0 0.0
      %2418 = vmatpush2.msra.mxu0 0.0
      %2419 = vmatprep.subr.mxu0 0.0
      %2420 = vmatpush2.msra.mxu0 0.0
      %2421 = vmatprep.subr.mxu0 0.0
      %2422 = vmatpush2.msra.mxu0 0.0
      %2423 = vmatprep.subr.mxu0 0.0
      %2424 = vmatpush2.msra.mxu0 0.0
      %2425 = vmatprep.subr.mxu0 0.0
      %2426 = vmatpush2.msra.mxu0 0.0
      %2427 = vmatprep.subr.mxu0 0.0
      %2428 = vmatpush2.msra.mxu0 0.0
      %2429 = vmatprep.subr.mxu0 0.0
      %2430 = vmatpush2.msra.mxu0 0.0
      %2431 = vmatprep.subr.mxu0 0.0
      %2432 = vmatpush2.msra.mxu0 0.0
      %2433 = vmatprep.subr.mxu0 0.0
      %2434 = vmatpush2.msra.mxu0 0.0
      %2435 = vmatprep.subr.mxu0 0.0
      %2436 = vmatpush2.msra.mxu0 0.0
      %2437 = vmatprep.subr.mxu0 0.0
      %2438 = vmatpush2.msra.mxu0 0.0
      %2439 = vmatprep.subr.mxu0 0.0
      %2440 = vmatpush2.msra.mxu0 0.0
      %2441 = vmatprep.subr.mxu0 0.0
      %2442 = vmatpush2.msra.mxu0 0.0
      %2443 = vmatprep.subr.mxu0 0.0
      %2444 = vmatpush2.msra.mxu0 0.0
      %2445 = vmatprep.subr.mxu0 0.0
      %2446 = vmatpush2.msra.mxu0 0.0
      %2447 = vmatprep.mubr.f32.mxu0 0.0
      %2448 = vmatmul.mubr.f32.gmra.mxu0 %v2379
      %v2449 = vpop.f32.mrf.mxu0
      %v2450 = vadd.f32 0.0, %v2449
      %v2451 = vpop.f32.mrf.mxu0
      %2452 = vmatprep.mubr.f32.mxu0 0.0
      %2453 = vmatmul.mubr.f32.gmra.mxu0 %v2381
      %v2454 = vpop.f32.mrf.mxu0
      %v2455 = vadd.f32 0.0, %v2454
      %v2456 = vpop.f32.mrf.mxu0
      %2457 = vdwg.mxu0
      %v2458 = vmul.f32 %v2450, %v1528
      %v2459 = vmul.f32 %v2455, %v1528
      %v2460 = vsel %vm1532, %v2458, 0.0
      %2461 = vadd.xlane.f32.xlu0 %v2460
      %v2462 = vpop.xlane.xlu0 %2461
      %v2463 = vsel %vm1532, %v2459, 0.0
      %2464 = vadd.xlane.f32.xlu0 %v2463
      %v2465 = vpop.xlane.xlu0 %2464
      %2468 = vrot.lane.b32.xlu0 %v1753, 32
      %v2469 = vpop.permute.xlu0 %2468
      %2470 = vrot.lane.b32.xlu0 %v1760, 32
      %v2471 = vpop.permute.xlu0 %2470
      %2474 = vrot.lane.b32.xlu0 %v2062, 64
      %v2475 = vpop.permute.xlu0 %2474
      %2476 = vrot.lane.b32.xlu0 %v2069, 64
      %v2477 = vpop.permute.xlu0 %2476
      %2480 = vrot.lane.b32.xlu0 %v2371, 96
      %v2481 = vpop.permute.xlu0 %2480
      %2482 = vrot.lane.b32.xlu0 %v2378, 96
      %v2483 = vpop.permute.xlu0 %2482
      %v2486 = vsel %vm824, %v1437, %v2469
      %v2487 = vsel %vm824, %v1444, %v2471
      %v2488 = vsel %vm1532, %v2486, %v2475
      %v2489 = vsel %vm1532, %v2487, %v2477
      %vm2490 = vcmask 785408
      %v2491 = vsel %vm2490, %v2488, %v2481
      %v2492 = vsel %vm2490, %v2489, %v2483
      %2493 = vst [vmem:[%s458] sm:$0xff] %v2491
      %2494 = vst [vmem:[%s458 + $0x8] sm:$0xff] %v2492
      %vm2495 = vcmask 7168
      %v2496 = vsel %vm2495, %v1535, %v1844
      %v2497 = vsel %vm2495, %v1538, %v1847
      %vm2498 = vcmask 15360
      %v2499 = vsel %vm2498, %v2496, %v2153
      %v2500 = vsel %vm2498, %v2497, %v2156
      %vm2501 = vcmask 23552
      %v2502 = vsel %vm2501, %v2499, %v2462
      %v2503 = vsel %vm2501, %v2500, %v2465
      %v2504 = vsel %vm1018, %v2502, -inf
      %2505 = vmax.xlane.f32.xlu0 %v2504
      %v2506 = vpop.xlane.xlu0 %2505
      %v2507 = vsel %vm1018, %v2503, -inf
      %2508 = vmax.xlane.f32.xlu0 %v2507
      %v2509 = vpop.xlane.xlu0 %2508
      %v2510 = vsub.f32 %v2502, %v2506
      %v2511 = vsub.f32 %v2503, %v2509
      %v2512 = vmul.f32 %v2510, 1.442695
      %v2513 = vpow.pop %v2512
      %v2514 = vmul.f32 %v2511, 1.442695
      %v2515 = vpow.pop %v2514
      %v2516 = vsel %vm1018, %v2513, 0.0
      %2517 = vadd.xlane.f32.xlu0 %v2516
      %v2518 = vpop.xlane.xlu0 %2517
      %v2519 = vsel %vm1018, %v2515, 0.0
      %2520 = vadd.xlane.f32.xlu0 %v2519
      %v2521 = vpop.xlane.xlu0 %2520
      %v2522 = vrcp.pop %v2518
      %v2523 = vrcp.pop %v2521
      %v2524 = vmul.f32 %v2513, %v2522
      %v2525 = vmul.f32 %v2515, %v2523
      %2527 = vset.pattern.permute.xlu0 0
      %2528 = vperm.xlu0 %2527, %v2524
      %v2529 = vpop.permute.xlu0 %2528
      %2532 = vset.pattern.permute.xlu0 0
      %2533 = vperm.xlu0 %2532, %v2525
      %v2534 = vpop.permute.xlu0 %2533
      %v2536 = vmul.f32 %v2529, %v1516
      %v2537 = vmul.f32 %v2534, %v1521
      %2538 = vset.pattern.permute.xlu0 1
      %2539 = vperm.xlu0 %2538, %v2524
      %v2540 = vpop.permute.xlu0 %2539
      %2542 = vset.pattern.permute.xlu0 1
      %2543 = vperm.xlu0 %2542, %v2525
      %v2544 = vpop.permute.xlu0 %2543
      %v2546 = vmul.f32 %v2540, %v1832
      %v2547 = vmul.f32 %v2544, %v1837
      %v2548 = vadd.f32 %v2536, %v2546
      %v2549 = vadd.f32 %v2537, %v2547
      %2550 = vset.pattern.permute.xlu0 2
      %2551 = vperm.xlu0 %2550, %v2524
      %v2552 = vpop.permute.xlu0 %2551
      %2554 = vset.pattern.permute.xlu0 2
      %2555 = vperm.xlu0 %2554, %v2525
      %v2556 = vpop.permute.xlu0 %2555
      %v2558 = vmul.f32 %v2552, %v2141
      %v2559 = vmul.f32 %v2556, %v2146
      %v2560 = vadd.f32 %v2548, %v2558
      %v2561 = vadd.f32 %v2549, %v2559
      %2562 = vset.pattern.permute.xlu0 3
      %2563 = vperm.xlu0 %2562, %v2524
      %v2564 = vpop.permute.xlu0 %2563
      %2566 = vset.pattern.permute.xlu0 3
      %2567 = vperm.xlu0 %2566, %v2525
      %v2568 = vpop.permute.xlu0 %2567
      %v2570 = vmul.f32 %v2564, %v2450
      %v2571 = vmul.f32 %v2568, %v2455
      %v2572 = vadd.f32 %v2560, %v2570
      %v2573 = vadd.f32 %v2561, %v2571
      %v2574 = vcombine.high %v2524, %v2524
      %v2576 = vunpack.c.l.s4 1966171168
      %v2577 = vunpack.c.0.s8 %v2576
      %v2578 = vlaneseq
      %v2579 = vshrl.u32 %v2578, 7
      %v2580 = vsub.s32 %v2577, %v2579
      %v2581 = vrot.slane %v2524, %v2580
      %v2583 = vunpack.c.l.s4 1966171168
      %v2584 = vunpack.c.0.s8 %v2583
      %v2585 = vlaneseq
      %v2586 = vshrl.u32 %v2585, 7
      %v2587 = vsub.s32 %v2584, %v2586
      %v2588 = vrot.slane %v2574, %v2587
      %v2589 = vcombine.high %v2581, %v2581
      %v2590 = vcombine.high %v2588, %v2588
      %v2592 = vunpack.c.l.s4 1966171168
      %v2593 = vunpack.c.0.s8 %v2592
      %v2594 = vlaneseq
      %v2595 = vshrl.u32 %v2594, 7
      %v2596 = vsub.s32 %v2593, %v2595
      %v2597 = vrot.slane %v2581, %v2596
      %v2599 = vunpack.c.l.s4 1966171168
      %v2600 = vunpack.c.0.s8 %v2599
      %v2601 = vlaneseq
      %v2602 = vshrl.u32 %v2601, 7
      %v2603 = vsub.s32 %v2600, %v2602
      %v2604 = vrot.slane %v2588, %v2603
      %v2606 = vunpack.c.l.s4 1966171168
      %v2607 = vunpack.c.0.s8 %v2606
      %v2608 = vlaneseq
      %v2609 = vshrl.u32 %v2608, 7
      %v2610 = vsub.s32 %v2607, %v2609
      %v2611 = vrot.slane %v2589, %v2610
      %v2613 = vunpack.c.l.s4 1966171168
      %v2614 = vunpack.c.0.s8 %v2613
      %v2615 = vlaneseq
      %v2616 = vshrl.u32 %v2615, 7
      %v2617 = vsub.s32 %v2614, %v2616
      %v2618 = vrot.slane %v2590, %v2617
      %v2619 = vcombine.high %v2597, %v2597
      %v2620 = vcombine.high %v2604, %v2604
      %v2621 = vcombine.high %v2611, %v2611
      %v2622 = vcombine.high %v2618, %v2618
      %v2623 = vcombine.high %v2525, %v2525
      %v2625 = vunpack.c.l.s4 1966171168
      %v2626 = vunpack.c.0.s8 %v2625
      %v2627 = vlaneseq
      %v2628 = vshrl.u32 %v2627, 7
      %v2629 = vsub.s32 %v2626, %v2628
      %v2630 = vrot.slane %v2525, %v2629
      %v2632 = vunpack.c.l.s4 1966171168
      %v2633 = vunpack.c.0.s8 %v2632
      %v2634 = vlaneseq
      %v2635 = vshrl.u32 %v2634, 7
      %v2636 = vsub.s32 %v2633, %v2635
      %v2637 = vrot.slane %v2623, %v2636
      %v2638 = vcombine.high %v2630, %v2630
      %v2639 = vcombine.high %v2637, %v2637
      %v2641 = vunpack.c.l.s4 1966171168
      %v2642 = vunpack.c.0.s8 %v2641
      %v2643 = vlaneseq
      %v2644 = vshrl.u32 %v2643, 7
      %v2645 = vsub.s32 %v2642, %v2644
      %v2646 = vrot.slane %v2630, %v2645
      %v2648 = vunpack.c.l.s4 1966171168
      %v2649 = vunpack.c.0.s8 %v2648
      %v2650 = vlaneseq
      %v2651 = vshrl.u32 %v2650, 7
      %v2652 = vsub.s32 %v2649, %v2651
      %v2653 = vrot.slane %v2637, %v2652
      %v2655 = vunpack.c.l.s4 1966171168
      %v2656 = vunpack.c.0.s8 %v2655
      %v2657 = vlaneseq
      %v2658 = vshrl.u32 %v2657, 7
      %v2659 = vsub.s32 %v2656, %v2658
      %v2660 = vrot.slane %v2638, %v2659
      %v2662 = vunpack.c.l.s4 1966171168
      %v2663 = vunpack.c.0.s8 %v2662
      %v2664 = vlaneseq
      %v2665 = vshrl.u32 %v2664, 7
      %v2666 = vsub.s32 %v2663, %v2665
      %v2667 = vrot.slane %v2639, %v2666
      %v2668 = vcombine.high %v2646, %v2646
      %v2669 = vcombine.high %v2653, %v2653
      %v2670 = vcombine.high %v2660, %v2660
      %v2671 = vcombine.high %v2667, %v2667
      %v2672 = vlaneseq
      %v2673 = vshrl.u32 %v2672, 7
      %v2674 = vsub.s32 0, %v2673
      %v2675 = vrot.slane %v2597, %v2674
      %v2676 = vlaneseq
      %v2677 = vshrl.u32 %v2676, 7
      %v2678 = vsub.s32 0, %v2677
      %v2679 = vrot.slane %v2611, %v2678
      %v2680 = vlaneseq
      %v2681 = vshrl.u32 %v2680, 7
      %v2682 = vsub.s32 0, %v2681
      %v2683 = vrot.slane %v2619, %v2682
      %v2684 = vlaneseq
      %v2685 = vshrl.u32 %v2684, 7
      %v2686 = vsub.s32 0, %v2685
      %v2687 = vrot.slane %v2621, %v2686
      %v2688 = vlaneseq
      %v2689 = vshrl.u32 %v2688, 7
      %v2690 = vsub.s32 0, %v2689
      %v2691 = vrot.slane %v2604, %v2690
      %v2692 = vlaneseq
      %v2693 = vshrl.u32 %v2692, 7
      %v2694 = vsub.s32 0, %v2693
      %v2695 = vrot.slane %v2618, %v2694
      %v2696 = vlaneseq
      %v2697 = vshrl.u32 %v2696, 7
      %v2698 = vsub.s32 0, %v2697
      %v2699 = vrot.slane %v2620, %v2698
      %v2700 = vlaneseq
      %v2701 = vshrl.u32 %v2700, 7
      %v2702 = vsub.s32 0, %v2701
      %v2703 = vrot.slane %v2622, %v2702
      %v2704 = vlaneseq
      %v2705 = vshrl.u32 %v2704, 7
      %v2706 = vsub.s32 0, %v2705
      %v2707 = vrot.slane %v2646, %v2706
      %v2708 = vlaneseq
      %v2709 = vshrl.u32 %v2708, 7
      %v2710 = vsub.s32 0, %v2709
      %v2711 = vrot.slane %v2660, %v2710
      %v2712 = vlaneseq
      %v2713 = vshrl.u32 %v2712, 7
      %v2714 = vsub.s32 0, %v2713
      %v2715 = vrot.slane %v2668, %v2714
      %v2716 = vlaneseq
      %v2717 = vshrl.u32 %v2716, 7
      %v2718 = vsub.s32 0, %v2717
      %v2719 = vrot.slane %v2670, %v2718
      %v2720 = vlaneseq
      %v2721 = vshrl.u32 %v2720, 7
      %v2722 = vsub.s32 0, %v2721
      %v2723 = vrot.slane %v2653, %v2722
      %v2724 = vlaneseq
      %v2725 = vshrl.u32 %v2724, 7
      %v2726 = vsub.s32 0, %v2725
      %v2727 = vrot.slane %v2667, %v2726
      %v2728 = vlaneseq
      %v2729 = vshrl.u32 %v2728, 7
      %v2730 = vsub.s32 0, %v2729
      %v2731 = vrot.slane %v2669, %v2730
      %v2732 = vlaneseq
      %v2733 = vshrl.u32 %v2732, 7
      %v2734 = vsub.s32 0, %v2733
      %v2735 = vrot.slane %v2671, %v2734
      %v2752 = vmul.f32 %v1179, %v2675
      %v2753 = vmul.f32 %v1180, %v2679
      %v2754 = vmul.f32 %v1181, %v2683
      %v2755 = vmul.f32 %v1182, %v2687
      %v2756 = vmul.f32 %v1183, %v2691
      %v2757 = vmul.f32 %v1184, %v2695
      %v2758 = vmul.f32 %v1185, %v2699
      %v2759 = vmul.f32 %v1186, %v2703
      %v2760 = vmul.f32 %v1187, %v2707
      %v2761 = vmul.f32 %v1188, %v2711
      %v2762 = vmul.f32 %v1189, %v2715
      %v2763 = vmul.f32 %v1190, %v2719
      %v2764 = vmul.f32 %v1191, %v2723
      %v2765 = vmul.f32 %v1192, %v2727
      %v2766 = vmul.f32 %v1193, %v2731
      %v2767 = vmul.f32 %v1194, %v2735
      %v2768 = vsel %vm1018, %v2752, 0.0
      %2769 = vadd.xlane.f32.xlu0 %v2768
      %v2770 = vpop.xlane.xlu0 %2769
      %v2771 = vsel %vm1018, %v2753, 0.0
      %2772 = vadd.xlane.f32.xlu0 %v2771
      %v2773 = vpop.xlane.xlu0 %2772
      %v2774 = vsel %vm1018, %v2754, 0.0
      %2775 = vadd.xlane.f32.xlu0 %v2774
      %v2776 = vpop.xlane.xlu0 %2775
      %v2777 = vsel %vm1018, %v2755, 0.0
      %2778 = vadd.xlane.f32.xlu0 %v2777
      %v2779 = vpop.xlane.xlu0 %2778
      %v2780 = vsel %vm1018, %v2756, 0.0
      %2781 = vadd.xlane.f32.xlu0 %v2780
      %v2782 = vpop.xlane.xlu0 %2781
      %v2783 = vsel %vm1018, %v2757, 0.0
      %2784 = vadd.xlane.f32.xlu0 %v2783
      %v2785 = vpop.xlane.xlu0 %2784
      %v2786 = vsel %vm1018, %v2758, 0.0
      %2787 = vadd.xlane.f32.xlu0 %v2786
      %v2788 = vpop.xlane.xlu0 %2787
      %v2789 = vsel %vm1018, %v2759, 0.0
      %2790 = vadd.xlane.f32.xlu0 %v2789
      %v2791 = vpop.xlane.xlu0 %2790
      %v2792 = vsel %vm1018, %v2760, 0.0
      %2793 = vadd.xlane.f32.xlu0 %v2792
      %v2794 = vpop.xlane.xlu0 %2793
      %v2795 = vsel %vm1018, %v2761, 0.0
      %2796 = vadd.xlane.f32.xlu0 %v2795
      %v2797 = vpop.xlane.xlu0 %2796
      %v2798 = vsel %vm1018, %v2762, 0.0
      %2799 = vadd.xlane.f32.xlu0 %v2798
      %v2800 = vpop.xlane.xlu0 %2799
      %v2801 = vsel %vm1018, %v2763, 0.0
      %2802 = vadd.xlane.f32.xlu0 %v2801
      %v2803 = vpop.xlane.xlu0 %2802
      %v2804 = vsel %vm1018, %v2764, 0.0
      %2805 = vadd.xlane.f32.xlu0 %v2804
      %v2806 = vpop.xlane.xlu0 %2805
      %v2807 = vsel %vm1018, %v2765, 0.0
      %2808 = vadd.xlane.f32.xlu0 %v2807
      %v2809 = vpop.xlane.xlu0 %2808
      %v2810 = vsel %vm1018, %v2766, 0.0
      %2811 = vadd.xlane.f32.xlu0 %v2810
      %v2812 = vpop.xlane.xlu0 %2811
      %v2813 = vsel %vm1018, %v2767, 0.0
      %2814 = vadd.xlane.f32.xlu0 %v2813
      %v2815 = vpop.xlane.xlu0 %2814
      %v2832 = vlaneseq
      %v2833 = vand.u32 %v2832, 127
      %v2834 = vlaneseq
      %v2835 = vshrl.u32 %v2834, 7
      %v2836 = vsub.s32 %v2833, %v2835
      %v2837 = vrot.slane %v2770, %v2836
      %v2838 = vlaneseq
      %v2839 = vshrl.u32 %v2838, 7
      %v2840 = vsub.s32 %v2833, %v2839
      %v2841 = vrot.slane %v2773, %v2840
      %v2842 = vlaneseq
      %v2843 = vshrl.u32 %v2842, 7
      %v2844 = vsub.s32 %v2833, %v2843
      %v2845 = vrot.slane %v2776, %v2844
      %v2846 = vlaneseq
      %v2847 = vshrl.u32 %v2846, 7
      %v2848 = vsub.s32 %v2833, %v2847
      %v2849 = vrot.slane %v2779, %v2848
      %v2850 = vlaneseq
      %v2851 = vshrl.u32 %v2850, 7
      %v2852 = vsub.s32 %v2833, %v2851
      %v2853 = vrot.slane %v2782, %v2852
      %v2854 = vlaneseq
      %v2855 = vshrl.u32 %v2854, 7
      %v2856 = vsub.s32 %v2833, %v2855
      %v2857 = vrot.slane %v2785, %v2856
      %v2858 = vlaneseq
      %v2859 = vshrl.u32 %v2858, 7
      %v2860 = vsub.s32 %v2833, %v2859
      %v2861 = vrot.slane %v2788, %v2860
      %v2862 = vlaneseq
      %v2863 = vshrl.u32 %v2862, 7
      %v2864 = vsub.s32 %v2833, %v2863
      %v2865 = vrot.slane %v2791, %v2864
      %v2866 = vlaneseq
      %v2867 = vshrl.u32 %v2866, 7
      %v2868 = vsub.s32 %v2833, %v2867
      %v2869 = vrot.slane %v2794, %v2868
      %v2870 = vlaneseq
      %v2871 = vshrl.u32 %v2870, 7
      %v2872 = vsub.s32 %v2833, %v2871
      %v2873 = vrot.slane %v2797, %v2872
      %v2874 = vlaneseq
      %v2875 = vshrl.u32 %v2874, 7
      %v2876 = vsub.s32 %v2833, %v2875
      %v2877 = vrot.slane %v2800, %v2876
      %v2878 = vlaneseq
      %v2879 = vshrl.u32 %v2878, 7
      %v2880 = vsub.s32 %v2833, %v2879
      %v2881 = vrot.slane %v2803, %v2880
      %v2882 = vlaneseq
      %v2883 = vshrl.u32 %v2882, 7
      %v2884 = vsub.s32 %v2833, %v2883
      %v2885 = vrot.slane %v2806, %v2884
      %v2886 = vlaneseq
      %v2887 = vshrl.u32 %v2886, 7
      %v2888 = vsub.s32 %v2833, %v2887
      %v2889 = vrot.slane %v2809, %v2888
      %v2890 = vlaneseq
      %v2891 = vshrl.u32 %v2890, 7
      %v2892 = vsub.s32 %v2833, %v2891
      %v2893 = vrot.slane %v2812, %v2892
      %v2894 = vlaneseq
      %v2895 = vshrl.u32 %v2894, 7
      %v2896 = vsub.s32 %v2833, %v2895
      %v2897 = vrot.slane %v2815, %v2896
      %v2898 = vsel %vm1424, %v2841, %v2837
      %v2899 = vsel %vm1426, %v2845, %v2898
      %v2900 = vsel %vm1428, %v2849, %v2899
      %v2901 = vsel %vm1430, %v2853, %v2900
      %v2902 = vsel %vm1432, %v2857, %v2901
      %v2903 = vsel %vm1434, %v2861, %v2902
      %v2904 = vsel %vm1436, %v2865, %v2903
      %v2905 = vsel %vm1424, %v2873, %v2869
      %v2906 = vsel %vm1426, %v2877, %v2905
      %v2907 = vsel %vm1428, %v2881, %v2906
      %v2908 = vsel %vm1430, %v2885, %v2907
      %v2909 = vsel %vm1432, %v2889, %v2908
      %v2910 = vsel %vm1434, %v2893, %v2909
      %v2911 = vsel %vm1436, %v2897, %v2910
      %vm2914 = vcmask 64512
      %2915 = vst.msk [vmem:[%s464] sm:$0xff] %vm2914, %v2904
      %2916 = vst.msk [vmem:[%s464 + $0x8] sm:$0xff] %vm2914, %v2911
      %v2917 = vmax.f32 %v2572, 0.0
      %v2918 = vmax.f32 %v2573, 0.0
      %v2919 = vld [vmem:[%s8] sm:$0xff]
      %v2920 = vld [vmem:[%s8 + $0x8] sm:$0xff]
      %v2921 = vld [vmem:[%s8 + $0x10] sm:$0xff]
      %v2922 = vld [vmem:[%s8 + $0x18] sm:$0xff]
      %v2923 = vld [vmem:[%s8 + $0x20] sm:$0xff]
      %v2924 = vld [vmem:[%s8 + $0x28] sm:$0xff]
      %v2925 = vld [vmem:[%s8 + $0x30] sm:$0xff]
      %v2926 = vld [vmem:[%s8 + $0x38] sm:$0xff]
      %v2927 = vld [vmem:[%s9] sm:$0x1]
      %v2929 = vlaneseq
      %v2930 = vshrl.u32 %v2929, 7
      %v2931 = vsub.s32 0, %v2930
      %v2932 = vrot.slane %v2927, %v2931
      %v2935 = vsel %vm1532, %v2917, 0
      %v2938 = vsel %vm1532, %v2918, 0
      %2940 = vmatprep.subr.mxu0 0.0
      %2941 = vmatpush1.msra.mxu0 0.0
      %2942 = vmatprep.subr.mxu0 0.0
      %2943 = vmatpush1.msra.mxu0 0.0
      %2944 = vmatprep.subr.mxu0 0.0
      %2945 = vmatpush1.msra.mxu0 0.0
      %2946 = vmatprep.subr.mxu0 0.0
      %2947 = vmatpush1.msra.mxu0 0.0
      %2948 = vmatprep.subr.mxu0 0.0
      %2949 = vmatpush1.msra.mxu0 0.0
      %2950 = vmatprep.subr.mxu0 0.0
      %2951 = vmatpush1.msra.mxu0 0.0
      %2952 = vmatprep.subr.mxu0 0.0
      %2953 = vmatpush1.msra.mxu0 0.0
      %2954 = vmatprep.subr.mxu0 0.0
      %2955 = vmatpush1.msra.mxu0 0.0
      %2956 = vmatprep.subr.mxu0 0.0
      %2957 = vmatpush1.msra.mxu0 %v2926
      %2958 = vmatprep.subr.mxu0 0.0
      %2959 = vmatpush1.msra.mxu0 %v2925
      %2960 = vmatprep.subr.mxu0 0.0
      %2961 = vmatpush1.msra.mxu0 %v2924
      %2962 = vmatprep.subr.mxu0 0.0
      %2963 = vmatpush1.msra.mxu0 %v2923
      %2964 = vmatprep.subr.mxu0 0.0
      %2965 = vmatpush1.msra.mxu0 %v2922
      %2966 = vmatprep.subr.mxu0 0.0
      %2967 = vmatpush1.msra.mxu0 %v2921
      %2968 = vmatprep.subr.mxu0 0.0
      %2969 = vmatpush1.msra.mxu0 %v2920
      %2970 = vmatprep.subr.mxu0 0.0
      %2971 = vmatpush1.msra.mxu0 %v2919
      %2972 = vmatprep.subr.mxu0 0.0
      %2973 = vmatpush2.msra.mxu0 0.0
      %2974 = vmatprep.subr.mxu0 0.0
      %2975 = vmatpush2.msra.mxu0 0.0
      %2976 = vmatprep.subr.mxu0 0.0
      %2977 = vmatpush2.msra.mxu0 0.0
      %2978 = vmatprep.subr.mxu0 0.0
      %2979 = vmatpush2.msra.mxu0 0.0
      %2980 = vmatprep.subr.mxu0 0.0
      %2981 = vmatpush2.msra.mxu0 0.0
      %2982 = vmatprep.subr.mxu0 0.0
      %2983 = vmatpush2.msra.mxu0 0.0
      %2984 = vmatprep.subr.mxu0 0.0
      %2985 = vmatpush2.msra.mxu0 0.0
      %2986 = vmatprep.subr.mxu0 0.0
      %2987 = vmatpush2.msra.mxu0 0.0
      %2988 = vmatprep.subr.mxu0 0.0
      %2989 = vmatpush2.msra.mxu0 0.0
      %2990 = vmatprep.subr.mxu0 0.0
      %2991 = vmatpush2.msra.mxu0 0.0
      %2992 = vmatprep.subr.mxu0 0.0
      %2993 = vmatpush2.msra.mxu0 0.0
      %2994 = vmatprep.subr.mxu0 0.0
      %2995 = vmatpush2.msra.mxu0 0.0
      %2996 = vmatprep.subr.mxu0 0.0
      %2997 = vmatpush2.msra.mxu0 0.0
      %2998 = vmatprep.subr.mxu0 0.0
      %2999 = vmatpush2.msra.mxu0 0.0
      %3000 = vmatprep.subr.mxu0 0.0
      %3001 = vmatpush2.msra.mxu0 0.0
      %3002 = vmatprep.subr.mxu0 0.0
      %3003 = vmatpush2.msra.mxu0 0.0
      %3004 = vmatprep.mubr.f32.mxu0 0.0
      %3005 = vmatmul.mubr.f32.gmra.mxu0 %v2935
      %v3006 = vpop.f32.mrf.mxu0
      %v3007 = vadd.f32 %v2932, %v3006
      %v3008 = vpop.f32.mrf.mxu0
      %3009 = vmatprep.mubr.f32.mxu0 0.0
      %3010 = vmatmul.mubr.f32.gmra.mxu0 %v2938
      %v3011 = vpop.f32.mrf.mxu0
      %v3012 = vadd.f32 %v2932, %v3011
      %v3013 = vpop.f32.mrf.mxu0
      %3014 = vdwg.mxu0
      %3015 = vst.msk [vmem:[%s452] sm:$0xff] %vm2501, %v3007
      %3016 = vst.msk [vmem:[%s452 + $0x8] sm:$0xff] %vm2501, %v3012
      %s3017 = smul.u32 2, %s24
      %p3018 = scmp.lt.s32.totalorder %s3017, 3
      %s3019 = scalar_select %p3018, %s3017, 3
      %s3020 = smul.addr %s3019, 8
      %s3021 = scalar_lea.vmem %s10, %s3020
      %s3022 = smul.u32 2, %s24
      %p3023 = scmp.lt.s32.totalorder %s3022, 3
      %s3024 = scalar_select %p3023, %s3022, 3
      %s3025 = smul.addr %s3024, 8
      %s3026 = scalar_lea.vmem %s11, %s3025
      %s3027 = smul.u32 2, %s24
      %p3028 = scmp.lt.s32.totalorder %s3027, 3
      %s3029 = scalar_select %p3028, %s3027, 3
      %s3030 = smul.addr %s3029, 8
      %s3031 = scalar_lea.vmem %s12, %s3030
      // Predicated region
      $region61: #{bgatt_forward.1} parent=59 // pred_check
        %p3032 = pneg %p262
      $region62: #{bgatt_forward.1} parent=59 // pred_check_branch
        %3034 = sbr.rel (%p3032) target = $region64
      $region63: #{bgatt_forward.1} parent=59 // pred_region
        %s3035 = smul.u32 2, %s24
      $region64: #{bgatt_forward.1} parent=59 // pred_fallthru
        _
      // Predicated region
      $region65: #{bgatt_forward.1} parent=59 // pred_check
        %p3036 = pneg %p288
      $region66: #{bgatt_forward.1} parent=59 // pred_check_branch
        %3038 = sbr.rel (%p3036) target = $region68
      $region67: #{bgatt_forward.1} parent=59 // pred_region
        %s3039 = smul.u32 2, %s24
      $region68: #{bgatt_forward.1} parent=59 // pred_fallthru
        _
      // Predicated region
      $region69: #{bgatt_forward.1} parent=59 // pred_check
        %p3040 = pneg %p314
      $region70: #{bgatt_forward.1} parent=59 // pred_check_branch
        %3042 = sbr.rel (%p3040) target = $region72
      $region71: #{bgatt_forward.1} parent=59 // pred_region
        %s3043 = smul.u32 2, %s24
      $region72: #{bgatt_forward.1} parent=59 // pred_fallthru
        _
    $region60: #{bgatt_forward.1} parent=5 // pred_fallthru
      _
    %p3044 = scmp.le.s32.totalorder 2, %s19
    // Predicated region
    $region73: #{bgatt_forward.1} parent=5 // pred_check
      %p3045 = pneg %p3044
    $region74: #{bgatt_forward.1} parent=5 // pred_check_branch
      %3047 = sbr.rel (%p3045) target = $region76
    $region75: #{bgatt_forward.1} parent=5 // pred_region
      %s3048 = ssub.s32 %s19, 2
      // Predicated region
      $region77: #{bgatt_forward.1} parent=75 // pred_check
        %p3049 = pneg %p268
      $region78: #{bgatt_forward.1} parent=75 // pred_check_branch
        %3051 = sbr.rel (%p3049) target = $region80
      $region79: #{bgatt_forward.1} parent=75 // pred_region
        %s3052 = smul.u32 2, %s25
        %p3053 = scmp.lt.s32.totalorder %s3052, 3
        %s3054 = scalar_select %p3053, %s3052, 3
        %s3055 = smul.addr %s3054, 8
        %s3056 = scalar_lea.vmem %s10, %s3055
      $region80: #{bgatt_forward.1} parent=75 // pred_fallthru
        _
      // Predicated region
      $region81: #{bgatt_forward.1} parent=75 // pred_check
        %p3057 = pneg %p294
      $region82: #{bgatt_forward.1} parent=75 // pred_check_branch
        %3059 = sbr.rel (%p3057) target = $region84
      $region83: #{bgatt_forward.1} parent=75 // pred_region
        %s3060 = smul.u32 2, %s25
        %p3061 = scmp.lt.s32.totalorder %s3060, 3
        %s3062 = scalar_select %p3061, %s3060, 3
        %s3063 = smul.addr %s3062, 8
        %s3064 = scalar_lea.vmem %s11, %s3063
      $region84: #{bgatt_forward.1} parent=75 // pred_fallthru
        _
      // Predicated region
      $region85: #{bgatt_forward.1} parent=75 // pred_check
        %p3065 = pneg %p320
      $region86: #{bgatt_forward.1} parent=75 // pred_check_branch
        %3067 = sbr.rel (%p3065) target = $region88
      $region87: #{bgatt_forward.1} parent=75 // pred_region
        %s3068 = smul.u32 2, %s25
        %p3069 = scmp.lt.s32.totalorder %s3068, 3
        %s3070 = scalar_select %p3069, %s3068, 3
        %s3071 = smul.addr %s3070, 8
        %s3072 = scalar_lea.vmem %s12, %s3071
      $region88: #{bgatt_forward.1} parent=75 // pred_fallthru
        _
    $region76: #{bgatt_forward.1} parent=5 // pred_fallthru
      _
  $region6: #{bgatt_forward.1} parent=0 // loop_footer
    %s23 = sadd.s32 1, %s19
  $region7: #{bgatt_forward.1} parent=0 // loop_footer_branch
    %18 = sbr.rel target = $region3
  $region8: #{bgatt_forward.1} parent=0 // loop_exit
    _

</llo_original>
